<compile_context>
chip_gen: v5e
topology: v5e:2x2
jax: 0.10.0
libtpu: 0.0.40
codegen_flags: <defaults>
</compile_context>

<pallas_src>
import functools

import jax
import jax.numpy as jnp
from jax.experimental import pallas as pl
from jax.experimental.pallas import tpu as pltpu


def _basic_block_kernel(x_ref, w1_ref, g1_ref, be1_ref, w2_ref, g2_ref, be2_ref,
                        out_ref, pad_ref, patch_ref, *, N, H, W, C, eps):
    NHW = N * H * W

    # ---- zero ONLY the 1-wide halo of the padded scratch (done once, reused) ----
    pad_ref[:, 0:1, :, :] = jnp.zeros((N, 1, W + 2, C), pad_ref.dtype)
    pad_ref[:, H + 1:H + 2, :, :] = jnp.zeros((N, 1, W + 2, C), pad_ref.dtype)
    pad_ref[:, :, 0:1, :] = jnp.zeros((N, H + 2, 1, C), pad_ref.dtype)
    pad_ref[:, :, W + 1:W + 2, :] = jnp.zeros((N, H + 2, 1, C), pad_ref.dtype)

    def conv3x3(w_ref):
        # im2col: pack the 9 shifted taps (bf16) into lane bands of patch_ref,
        # then a single MXU matmul with contraction depth K = 9*C, f32 accumulate.
        for ky in range(3):
            for kx in range(3):
                t = ky * 3 + kx
                tap = pad_ref[:, ky:ky + H, kx:kx + W, :].reshape(NHW, C)
                patch_ref[:, t * C:(t + 1) * C] = tap.astype(patch_ref.dtype)
        return jnp.dot(patch_ref[...], w_ref[...],
                       preferred_element_type=jnp.float32)

    def bn_fold(y, g, be):
        # Training-mode batch stats (biased var), single pass, folded to scale/shift.
        mu = jnp.mean(y, axis=0, keepdims=True)                    # (1, C)
        msq = jnp.mean(y * y, axis=0, keepdims=True)               # (1, C)
        var = msq - mu * mu
        scale = g * jax.lax.rsqrt(var + eps)                       # (1, C)
        shift = be - mu * scale                                    # (1, C)
        return y * scale + shift                                   # 1 mul + 1 add / elem

    # ---------------- conv1 -> bn1 -> relu ----------------
    x = x_ref[...]                                                 # (N, H, W, C) f32
    pad_ref[:, 1:H + 1, 1:W + 1, :] = x.astype(pad_ref.dtype)
    y1 = conv3x3(w1_ref)                                           # (NHW, C) f32
    h1 = jnp.maximum(bn_fold(y1, g1_ref[...], be1_ref[...]), 0.0)

    # ---------------- conv2 -> bn2 ----------------
    pad_ref[:, 1:H + 1, 1:W + 1, :] = h1.reshape(N, H, W, C).astype(pad_ref.dtype)
    y2 = conv3x3(w2_ref)
    o = bn_fold(y2, g2_ref[...], be2_ref[...])

    # ---------------- residual add + relu ----------------
    out_ref[...] = jnp.maximum(x.reshape(NHW, C) + o, 0.0).reshape(N, H, W, C)


def resnet_basic_block(x_nchw, params, eps=1e-5):
    """Forward pass of ResNetBasicBlock (stride=1, in_channels == out_channels)."""
    N, C, H, W = x_nchw.shape
    x = jnp.transpose(x_nchw, (0, 2, 3, 1)).astype(jnp.float32)    # NCHW -> NHWC

    def prep_w(w):  # torch (Cout, Cin, 3, 3) -> (9*Cin, Cout), bf16 MXU operand
        return jnp.transpose(w, (2, 3, 1, 0)).reshape(9 * C, C).astype(jnp.bfloat16)

    w1 = prep_w(params["conv1_w"])
    w2 = prep_w(params["conv2_w"])
    g1 = params["bn1_gamma"].reshape(1, C).astype(jnp.float32)
    be1 = params["bn1_beta"].reshape(1, C).astype(jnp.float32)
    g2 = params["bn2_gamma"].reshape(1, C).astype(jnp.float32)
    be2 = params["bn2_beta"].reshape(1, C).astype(jnp.float32)
    # conv biases are intentionally not passed: they cancel exactly under
    # training-mode BatchNorm (per-channel constant removed by mean subtraction).

    kernel = functools.partial(_basic_block_kernel, N=N, H=H, W=W, C=C, eps=eps)
    vmem = pl.BlockSpec(memory_space=pltpu.MemorySpace.VMEM)
    out_nhwc = pl.pallas_call(
        kernel,
        out_shape=jax.ShapeDtypeStruct((N, H, W, C), jnp.float32),
        in_specs=[vmem] * 7,
        out_specs=vmem,
        scratch_shapes=[
            pltpu.VMEM((N, H + 2, W + 2, C), jnp.float32),         # padded activations
            pltpu.VMEM((N * H * W, 9 * C), jnp.bfloat16),          # im2col patch matrix
        ],
        compiler_params=pltpu.CompilerParams(vmem_limit_bytes=32 * 1024 * 1024),
    )(x, w1, g1, be1, w2, g2, be2)

    return jnp.transpose(out_nhwc, (0, 3, 1, 2))                   # NHWC -> NCHW


def _ref_forward(x, params, eps=1e-5):
    """Pure-JAX reference mirroring the PyTorch forward (training-mode BN)."""
    def conv(y, w, b):
        z = jax.lax.conv_general_dilated(
            y, w, window_strides=(1, 1), padding=((1, 1), (1, 1)),
            dimension_numbers=("NCHW", "OIHW", "NCHW"))
        return z + b[None, :, None, None]

    def bn(y, g, be):
        mu = jnp.mean(y, axis=(0, 2, 3), keepdims=True)
        var = jnp.mean((y - mu) ** 2, axis=(0, 2, 3), keepdims=True)
        return ((y - mu) * jax.lax.rsqrt(var + eps)
                * g[None, :, None, None] + be[None, :, None, None])

    h = jax.nn.relu(bn(conv(x, params["conv1_w"], params["conv1_b"]),
                       params["bn1_gamma"], params["bn1_beta"]))
    o = bn(conv(h, params["conv2_w"], params["conv2_b"]),
           params["bn2_gamma"], params["bn2_beta"])
    return jax.nn.relu(x + o)


if __name__ == "__main__":
    key = jax.random.PRNGKey(0)
    N, C, H, W = 2, 8, 8, 8                     # small shapes; in_ch == out_ch, stride = 1
    ks = jax.random.split(key, 7)

    x = jax.random.normal(ks[0], (N, C, H, W), jnp.float32)
    params = {
        "conv1_w": jax.random.normal(ks[1], (C, C, 3, 3), jnp.float32) * 0.1,
        "conv1_b": jax.random.normal(ks[2], (C,), jnp.float32) * 0.1,
        "conv2_w": jax.random.normal(ks[3], (C, C, 3, 3), jnp.float32) * 0.1,
        "conv2_b": jax.random.normal(ks[4], (C,), jnp.float32) * 0.1,
        "bn1_gamma": 1.0 + 0.1 * jax.random.normal(ks[5], (C,), jnp.float32),
        "bn1_beta": jnp.zeros((C,), jnp.float32),
        "bn2_gamma": 1.0 + 0.1 * jax.random.normal(ks[6], (C,), jnp.float32),
        "bn2_beta": jnp.zeros((C,), jnp.float32),
    }

    out = resnet_basic_block(x, params)
    jax.block_until_ready(out)

    ref = _ref_forward(x, params)
    assert out.shape == ref.shape == (N, C, H, W)
    # bf16 matmul operands (f32 accumulation) -> small numerical drift vs f32 reference
    assert jnp.allclose(out, ref, atol=5e-2, rtol=5e-2), "mismatch vs pure-JAX reference"

    print("KERNEL_OK")
</pallas_src>

<mosaic_0001>
module attributes {stable_mosaic.version = 11 : i64} {
  func.func @_basic_block_kernel(%arg0: memref<2x8x8x8xf32, #tpu.memory_space<vmem>>, %arg1: memref<72x8xbf16, #tpu.memory_space<vmem>>, %arg2: memref<1x8xf32, #tpu.memory_space<vmem>>, %arg3: memref<1x8xf32, #tpu.memory_space<vmem>>, %arg4: memref<72x8xbf16, #tpu.memory_space<vmem>>, %arg5: memref<1x8xf32, #tpu.memory_space<vmem>>, %arg6: memref<1x8xf32, #tpu.memory_space<vmem>>, %arg7: memref<2x8x8x8xf32, #tpu.memory_space<vmem>>, %arg8: memref<2x10x10x8xf32, #tpu.memory_space<vmem>>, %arg9: memref<128x72xbf16, #tpu.memory_space<vmem>>) attributes {dimension_semantics = [], scalar_prefetch = 0 : i64, scratch_operands = 2 : i64, tpu.core_type = #tpu.core_type<tc>} {
    %cst = arith.constant 0.000000e+00 : f32
    %0 = vector.broadcast %cst : f32 to vector<2x1x10x8xf32>
    %c0 = arith.constant 0 : index
    %c0_0 = arith.constant 0 : index
    %c0_1 = arith.constant 0 : index
    %c0_2 = arith.constant 0 : index
    %1 = vector.load %arg8[%c0, %c0_0, %c0_1, %c0_2] : memref<2x10x10x8xf32, #tpu.memory_space<vmem>>, vector<2x1x10x8xf32>
    tpu.vector_store %arg8[%c0, %c0_0, %c0_1, %c0_2], %0 {strides = array<i32>} : memref<2x10x10x8xf32, #tpu.memory_space<vmem>>, vector<2x1x10x8xf32>,
    %cst_3 = arith.constant 0.000000e+00 : f32
    %2 = vector.broadcast %cst_3 : f32 to vector<2x1x10x8xf32>
    %c0_4 = arith.constant 0 : index
    %c9 = arith.constant 9 : index
    %c0_5 = arith.constant 0 : index
    %c0_6 = arith.constant 0 : index
    %3 = vector.load %arg8[%c0_4, %c9, %c0_5, %c0_6] : memref<2x10x10x8xf32, #tpu.memory_space<vmem>>, vector<2x1x10x8xf32>
    tpu.vector_store %arg8[%c0_4, %c9, %c0_5, %c0_6], %2 {strides = array<i32>} : memref<2x10x10x8xf32, #tpu.memory_space<vmem>>, vector<2x1x10x8xf32>,
    %cst_7 = arith.constant 0.000000e+00 : f32
    %4 = vector.broadcast %cst_7 : f32 to vector<2x10x1x8xf32>
    %c0_8 = arith.constant 0 : index
    %c0_9 = arith.constant 0 : index
    %c0_10 = arith.constant 0 : index
    %c0_11 = arith.constant 0 : index
    %5 = vector.load %arg8[%c0_8, %c0_9, %c0_10, %c0_11] : memref<2x10x10x8xf32, #tpu.memory_space<vmem>>, vector<2x10x1x8xf32>
    tpu.vector_store %arg8[%c0_8, %c0_9, %c0_10, %c0_11], %4 {strides = array<i32>} : memref<2x10x10x8xf32, #tpu.memory_space<vmem>>, vector<2x10x1x8xf32>,
    %cst_12 = arith.constant 0.000000e+00 : f32
    %6 = vector.broadcast %cst_12 : f32 to vector<2x10x1x8xf32>
    %c0_13 = arith.constant 0 : index
    %c0_14 = arith.constant 0 : index
    %c9_15 = arith.constant 9 : index
    %c0_16 = arith.constant 0 : index
    %7 = vector.load %arg8[%c0_13, %c0_14, %c9_15, %c0_16] : memref<2x10x10x8xf32, #tpu.memory_space<vmem>>, vector<2x10x1x8xf32>
    tpu.vector_store %arg8[%c0_13, %c0_14, %c9_15, %c0_16], %6 {strides = array<i32>} : memref<2x10x10x8xf32, #tpu.memory_space<vmem>>, vector<2x10x1x8xf32>,
    %c0_17 = arith.constant 0 : index
    %c0_18 = arith.constant 0 : index
    %c0_19 = arith.constant 0 : index
    %c0_20 = arith.constant 0 : index
    %8 = vector.load %arg0[%c0_17, %c0_18, %c0_19, %c0_20] : memref<2x8x8x8xf32, #tpu.memory_space<vmem>>, vector<2x8x8x8xf32>
    %c0_21 = arith.constant 0 : index
    %c1 = arith.constant 1 : index
    %c1_22 = arith.constant 1 : index
    %c0_23 = arith.constant 0 : index
    %9 = vector.load %arg8[%c0_21, %c1, %c1_22, %c0_23] : memref<2x10x10x8xf32, #tpu.memory_space<vmem>>, vector<2x8x8x8xf32>
    tpu.vector_store %arg8[%c0_21, %c1, %c1_22, %c0_23], %8 {strides = array<i32>} : memref<2x10x10x8xf32, #tpu.memory_space<vmem>>, vector<2x8x8x8xf32>,
    %c0_24 = arith.constant 0 : index
    %c0_25 = arith.constant 0 : index
    %c0_26 = arith.constant 0 : index
    %c0_27 = arith.constant 0 : index
    %10 = vector.load %arg8[%c0_24, %c0_25, %c0_26, %c0_27] : memref<2x10x10x8xf32, #tpu.memory_space<vmem>>, vector<2x8x8x8xf32>
    %11 = vector.shape_cast %10 : vector<2x8x8x8xf32> to vector<128x8xf32>
    %12 = arith.truncf %11 : vector<128x8xf32> to vector<128x8xbf16>
    %c0_28 = arith.constant 0 : index
    %c0_29 = arith.constant 0 : index
    %13 = vector.load %arg9[%c0_28, %c0_29] : memref<128x72xbf16, #tpu.memory_space<vmem>>, vector<128x8xbf16>
    tpu.vector_store %arg9[%c0_28, %c0_29], %12 {strides = array<i32>} : memref<128x72xbf16, #tpu.memory_space<vmem>>, vector<128x8xbf16>,
    %c0_30 = arith.constant 0 : index
    %c0_31 = arith.constant 0 : index
    %c1_32 = arith.constant 1 : index
    %c0_33 = arith.constant 0 : index
    %14 = vector.load %arg8[%c0_30, %c0_31, %c1_32, %c0_33] : memref<2x10x10x8xf32, #tpu.memory_space<vmem>>, vector<2x8x8x8xf32>
    %15 = vector.shape_cast %14 : vector<2x8x8x8xf32> to vector<128x8xf32>
    %16 = arith.truncf %15 : vector<128x8xf32> to vector<128x8xbf16>
    %c0_34 = arith.constant 0 : index
    %c8 = arith.constant 8 : index
    %17 = vector.load %arg9[%c0_34, %c8] : memref<128x72xbf16, #tpu.memory_space<vmem>>, vector<128x8xbf16>
    tpu.vector_store %arg9[%c0_34, %c8], %16 {strides = array<i32>} : memref<128x72xbf16, #tpu.memory_space<vmem>>, vector<128x8xbf16>,
    %c0_35 = arith.constant 0 : index
    %c0_36 = arith.constant 0 : index
    %c2 = arith.constant 2 : index
    %c0_37 = arith.constant 0 : index
    %18 = vector.load %arg8[%c0_35, %c0_36, %c2, %c0_37] : memref<2x10x10x8xf32, #tpu.memory_space<vmem>>, vector<2x8x8x8xf32>
    %19 = vector.shape_cast %18 : vector<2x8x8x8xf32> to vector<128x8xf32>
    %20 = arith.truncf %19 : vector<128x8xf32> to vector<128x8xbf16>
    %c0_38 = arith.constant 0 : index
    %c16 = arith.constant 16 : index
    %21 = vector.load %arg9[%c0_38, %c16] : memref<128x72xbf16, #tpu.memory_space<vmem>>, vector<128x8xbf16>
    tpu.vector_store %arg9[%c0_38, %c16], %20 {strides = array<i32>} : memref<128x72xbf16, #tpu.memory_space<vmem>>, vector<128x8xbf16>,
    %c0_39 = arith.constant 0 : index
    %c1_40 = arith.constant 1 : index
    %c0_41 = arith.constant 0 : index
    %c0_42 = arith.constant 0 : index
    %22 = vector.load %arg8[%c0_39, %c1_40, %c0_41, %c0_42] : memref<2x10x10x8xf32, #tpu.memory_space<vmem>>, vector<2x8x8x8xf32>
    %23 = vector.shape_cast %22 : vector<2x8x8x8xf32> to vector<128x8xf32>
    %24 = arith.truncf %23 : vector<128x8xf32> to vector<128x8xbf16>
    %c0_43 = arith.constant 0 : index
    %c24 = arith.constant 24 : index
    %25 = vector.load %arg9[%c0_43, %c24] : memref<128x72xbf16, #tpu.memory_space<vmem>>, vector<128x8xbf16>
    tpu.vector_store %arg9[%c0_43, %c24], %24 {strides = array<i32>} : memref<128x72xbf16, #tpu.memory_space<vmem>>, vector<128x8xbf16>,
    %c0_44 = arith.constant 0 : index
    %c1_45 = arith.constant 1 : index
    %c1_46 = arith.constant 1 : index
    %c0_47 = arith.constant 0 : index
    %26 = vector.load %arg8[%c0_44, %c1_45, %c1_46, %c0_47] : memref<2x10x10x8xf32, #tpu.memory_space<vmem>>, vector<2x8x8x8xf32>
    %27 = vector.shape_cast %26 : vector<2x8x8x8xf32> to vector<128x8xf32>
    %28 = arith.truncf %27 : vector<128x8xf32> to vector<128x8xbf16>
    %c0_48 = arith.constant 0 : index
    %c32 = arith.constant 32 : index
    %29 = vector.load %arg9[%c0_48, %c32] : memref<128x72xbf16, #tpu.memory_space<vmem>>, vector<128x8xbf16>
    tpu.vector_store %arg9[%c0_48, %c32], %28 {strides = array<i32>} : memref<128x72xbf16, #tpu.memory_space<vmem>>, vector<128x8xbf16>,
    %c0_49 = arith.constant 0 : index
    %c1_50 = arith.constant 1 : index
    %c2_51 = arith.constant 2 : index
    %c0_52 = arith.constant 0 : index
    %30 = vector.load %arg8[%c0_49, %c1_50, %c2_51, %c0_52] : memref<2x10x10x8xf32, #tpu.memory_space<vmem>>, vector<2x8x8x8xf32>
    %31 = vector.shape_cast %30 : vector<2x8x8x8xf32> to vector<128x8xf32>
    %32 = arith.truncf %31 : vector<128x8xf32> to vector<128x8xbf16>
    %c0_53 = arith.constant 0 : index
    %c40 = arith.constant 40 : index
    %33 = vector.load %arg9[%c0_53, %c40] : memref<128x72xbf16, #tpu.memory_space<vmem>>, vector<128x8xbf16>
    tpu.vector_store %arg9[%c0_53, %c40], %32 {strides = array<i32>} : memref<128x72xbf16, #tpu.memory_space<vmem>>, vector<128x8xbf16>,
    %c0_54 = arith.constant 0 : index
    %c2_55 = arith.constant 2 : index
    %c0_56 = arith.constant 0 : index
    %c0_57 = arith.constant 0 : index
    %34 = vector.load %arg8[%c0_54, %c2_55, %c0_56, %c0_57] : memref<2x10x10x8xf32, #tpu.memory_space<vmem>>, vector<2x8x8x8xf32>
    %35 = vector.shape_cast %34 : vector<2x8x8x8xf32> to vector<128x8xf32>
    %36 = arith.truncf %35 : vector<128x8xf32> to vector<128x8xbf16>
    %c0_58 = arith.constant 0 : index
    %c48 = arith.constant 48 : index
    %37 = vector.load %arg9[%c0_58, %c48] : memref<128x72xbf16, #tpu.memory_space<vmem>>, vector<128x8xbf16>
    tpu.vector_store %arg9[%c0_58, %c48], %36 {strides = array<i32>} : memref<128x72xbf16, #tpu.memory_space<vmem>>, vector<128x8xbf16>,
    %c0_59 = arith.constant 0 : index
    %c2_60 = arith.constant 2 : index
    %c1_61 = arith.constant 1 : index
    %c0_62 = arith.constant 0 : index
    %38 = vector.load %arg8[%c0_59, %c2_60, %c1_61, %c0_62] : memref<2x10x10x8xf32, #tpu.memory_space<vmem>>, vector<2x8x8x8xf32>
    %39 = vector.shape_cast %38 : vector<2x8x8x8xf32> to vector<128x8xf32>
    %40 = arith.truncf %39 : vector<128x8xf32> to vector<128x8xbf16>
    %c0_63 = arith.constant 0 : index
    %c56 = arith.constant 56 : index
    %41 = vector.load %arg9[%c0_63, %c56] : memref<128x72xbf16, #tpu.memory_space<vmem>>, vector<128x8xbf16>
    tpu.vector_store %arg9[%c0_63, %c56], %40 {strides = array<i32>} : memref<128x72xbf16, #tpu.memory_space<vmem>>, vector<128x8xbf16>,
    %c0_64 = arith.constant 0 : index
    %c2_65 = arith.constant 2 : index
    %c2_66 = arith.constant 2 : index
    %c0_67 = arith.constant 0 : index
    %42 = vector.load %arg8[%c0_64, %c2_65, %c2_66, %c0_67] : memref<2x10x10x8xf32, #tpu.memory_space<vmem>>, vector<2x8x8x8xf32>
    %43 = vector.shape_cast %42 : vector<2x8x8x8xf32> to vector<128x8xf32>
    %44 = arith.truncf %43 : vector<128x8xf32> to vector<128x8xbf16>
    %c0_68 = arith.constant 0 : index
    %c64 = arith.constant 64 : index
    %45 = vector.load %arg9[%c0_68, %c64] : memref<128x72xbf16, #tpu.memory_space<vmem>>, vector<128x8xbf16>
    tpu.vector_store %arg9[%c0_68, %c64], %44 {strides = array<i32>} : memref<128x72xbf16, #tpu.memory_space<vmem>>, vector<128x8xbf16>,
    %c0_69 = arith.constant 0 : index
    %c0_70 = arith.constant 0 : index
    %46 = vector.load %arg9[%c0_69, %c0_70] : memref<128x72xbf16, #tpu.memory_space<vmem>>, vector<128x72xbf16>
    %c0_71 = arith.constant 0 : index
    %c0_72 = arith.constant 0 : index
    %47 = vector.load %arg1[%c0_71, %c0_72] : memref<72x8xbf16, #tpu.memory_space<vmem>>, vector<72x8xbf16>
    %cst_73 = arith.constant dense<0.000000e+00> : vector<128x8xf32>
    %48 = tpu.matmul %46, %47, %cst_73 {dimension_numbers = #tpu.dot_dimension_numbers<[1], [0], [0], [1], [0, 0, 1, 1], [], []>} : vector<128x72xbf16>, vector<72x8xbf16>, vector<128x8xf32> -> vector<128x8xf32>
    %c0_74 = arith.constant 0 : index
    %c0_75 = arith.constant 0 : index
    %49 = vector.load %arg2[%c0_74, %c0_75] : memref<1x8xf32, #tpu.memory_space<vmem>>, vector<1x8xf32>
    %c0_76 = arith.constant 0 : index
    %c0_77 = arith.constant 0 : index
    %50 = vector.load %arg3[%c0_76, %c0_77] : memref<1x8xf32, #tpu.memory_space<vmem>>, vector<1x8xf32>
    %cst_78 = arith.constant dense<0.000000e+00> : vector<8xf32>
    %51 = vector.multi_reduction <add>, %48, %cst_78 [0] : vector<128x8xf32> to vector<8xf32>
    %52 = vector.shape_cast %51 : vector<8xf32> to vector<1x8xf32>
    %cst_79 = arith.constant 1.280000e+02 : f32
    %53 = vector.broadcast %cst_79 : f32 to vector<1x8xf32>
    %54 = arith.divf %52, %53 : vector<1x8xf32>
    %55 = arith.mulf %48, %48 : vector<128x8xf32>
    %cst_80 = arith.constant dense<0.000000e+00> : vector<8xf32>
    %56 = vector.multi_reduction <add>, %55, %cst_80 [0] : vector<128x8xf32> to vector<8xf32>
    %57 = vector.shape_cast %56 : vector<8xf32> to vector<1x8xf32>
    %cst_81 = arith.constant 1.280000e+02 : f32
    %58 = vector.broadcast %cst_81 : f32 to vector<1x8xf32>
    %59 = arith.divf %57, %58 : vector<1x8xf32>
    %60 = arith.mulf %54, %54 : vector<1x8xf32>
    %61 = arith.subf %59, %60 : vector<1x8xf32>
    %cst_82 = arith.constant 9.99999974E-6 : f32
    %62 = vector.broadcast %cst_82 : f32 to vector<1x8xf32>
    %63 = arith.addf %61, %62 : vector<1x8xf32>
    %64 = math.rsqrt %63 : vector<1x8xf32>
    %65 = arith.mulf %49, %64 : vector<1x8xf32>
    %66 = arith.mulf %54, %65 : vector<1x8xf32>
    %67 = arith.subf %50, %66 : vector<1x8xf32>
    %68 = vector.broadcast %65 : vector<1x8xf32> to vector<128x8xf32>
    %69 = arith.mulf %48, %68 : vector<128x8xf32>
    %70 = vector.broadcast %67 : vector<1x8xf32> to vector<128x8xf32>
    %71 = arith.addf %69, %70 : vector<128x8xf32>
    %cst_83 = arith.constant 0.000000e+00 : f32
    %72 = vector.broadcast %cst_83 : f32 to vector<128x8xf32>
    %73 = arith.maximumf %71, %72 : vector<128x8xf32>
    %74 = vector.shape_cast %73 : vector<128x8xf32> to vector<2x8x8x8xf32>
    %c0_84 = arith.constant 0 : index
    %c1_85 = arith.constant 1 : index
    %c1_86 = arith.constant 1 : index
    %c0_87 = arith.constant 0 : index
    %75 = vector.load %arg8[%c0_84, %c1_85, %c1_86, %c0_87] : memref<2x10x10x8xf32, #tpu.memory_space<vmem>>, vector<2x8x8x8xf32>
    tpu.vector_store %arg8[%c0_84, %c1_85, %c1_86, %c0_87], %74 {strides = array<i32>} : memref<2x10x10x8xf32, #tpu.memory_space<vmem>>, vector<2x8x8x8xf32>,
    %c0_88 = arith.constant 0 : index
    %c0_89 = arith.constant 0 : index
    %c0_90 = arith.constant 0 : index
    %c0_91 = arith.constant 0 : index
    %76 = vector.load %arg8[%c0_88, %c0_89, %c0_90, %c0_91] : memref<2x10x10x8xf32, #tpu.memory_space<vmem>>, vector<2x8x8x8xf32>
    %77 = vector.shape_cast %76 : vector<2x8x8x8xf32> to vector<128x8xf32>
    %78 = arith.truncf %77 : vector<128x8xf32> to vector<128x8xbf16>
    %c0_92 = arith.constant 0 : index
    %c0_93 = arith.constant 0 : index
    %79 = vector.load %arg9[%c0_92, %c0_93] : memref<128x72xbf16, #tpu.memory_space<vmem>>, vector<128x8xbf16>
    tpu.vector_store %arg9[%c0_92, %c0_93], %78 {strides = array<i32>} : memref<128x72xbf16, #tpu.memory_space<vmem>>, vector<128x8xbf16>,
    %c0_94 = arith.constant 0 : index
    %c0_95 = arith.constant 0 : index
    %c1_96 = arith.constant 1 : index
    %c0_97 = arith.constant 0 : index
    %80 = vector.load %arg8[%c0_94, %c0_95, %c1_96, %c0_97] : memref<2x10x10x8xf32, #tpu.memory_space<vmem>>, vector<2x8x8x8xf32>
    %81 = vector.shape_cast %80 : vector<2x8x8x8xf32> to vector<128x8xf32>
    %82 = arith.truncf %81 : vector<128x8xf32> to vector<128x8xbf16>
    %c0_98 = arith.constant 0 : index
    %c8_99 = arith.constant 8 : index
    %83 = vector.load %arg9[%c0_98, %c8_99] : memref<128x72xbf16, #tpu.memory_space<vmem>>, vector<128x8xbf16>
    tpu.vector_store %arg9[%c0_98, %c8_99], %82 {strides = array<i32>} : memref<128x72xbf16, #tpu.memory_space<vmem>>, vector<128x8xbf16>,
    %c0_100 = arith.constant 0 : index
    %c0_101 = arith.constant 0 : index
    %c2_102 = arith.constant 2 : index
    %c0_103 = arith.constant 0 : index
    %84 = vector.load %arg8[%c0_100, %c0_101, %c2_102, %c0_103] : memref<2x10x10x8xf32, #tpu.memory_space<vmem>>, vector<2x8x8x8xf32>
    %85 = vector.shape_cast %84 : vector<2x8x8x8xf32> to vector<128x8xf32>
    %86 = arith.truncf %85 : vector<128x8xf32> to vector<128x8xbf16>
    %c0_104 = arith.constant 0 : index
    %c16_105 = arith.constant 16 : index
    %87 = vector.load %arg9[%c0_104, %c16_105] : memref<128x72xbf16, #tpu.memory_space<vmem>>, vector<128x8xbf16>
    tpu.vector_store %arg9[%c0_104, %c16_105], %86 {strides = array<i32>} : memref<128x72xbf16, #tpu.memory_space<vmem>>, vector<128x8xbf16>,
    %c0_106 = arith.constant 0 : index
    %c1_107 = arith.constant 1 : index
    %c0_108 = arith.constant 0 : index
    %c0_109 = arith.constant 0 : index
    %88 = vector.load %arg8[%c0_106, %c1_107, %c0_108, %c0_109] : memref<2x10x10x8xf32, #tpu.memory_space<vmem>>, vector<2x8x8x8xf32>
    %89 = vector.shape_cast %88 : vector<2x8x8x8xf32> to vector<128x8xf32>
    %90 = arith.truncf %89 : vector<128x8xf32> to vector<128x8xbf16>
    %c0_110 = arith.constant 0 : index
    %c24_111 = arith.constant 24 : index
    %91 = vector.load %arg9[%c0_110, %c24_111] : memref<128x72xbf16, #tpu.memory_space<vmem>>, vector<128x8xbf16>
    tpu.vector_store %arg9[%c0_110, %c24_111], %90 {strides = array<i32>} : memref<128x72xbf16, #tpu.memory_space<vmem>>, vector<128x8xbf16>,
    %c0_112 = arith.constant 0 : index
    %c1_113 = arith.constant 1 : index
    %c1_114 = arith.constant 1 : index
    %c0_115 = arith.constant 0 : index
    %92 = vector.load %arg8[%c0_112, %c1_113, %c1_114, %c0_115] : memref<2x10x10x8xf32, #tpu.memory_space<vmem>>, vector<2x8x8x8xf32>
    %93 = vector.shape_cast %92 : vector<2x8x8x8xf32> to vector<128x8xf32>
    %94 = arith.truncf %93 : vector<128x8xf32> to vector<128x8xbf16>
    %c0_116 = arith.constant 0 : index
    %c32_117 = arith.constant 32 : index
    %95 = vector.load %arg9[%c0_116, %c32_117] : memref<128x72xbf16, #tpu.memory_space<vmem>>, vector<128x8xbf16>
    tpu.vector_store %arg9[%c0_116, %c32_117], %94 {strides = array<i32>} : memref<128x72xbf16, #tpu.memory_space<vmem>>, vector<128x8xbf16>,
    %c0_118 = arith.constant 0 : index
    %c1_119 = arith.constant 1 : index
    %c2_120 = arith.constant 2 : index
    %c0_121 = arith.constant 0 : index
    %96 = vector.load %arg8[%c0_118, %c1_119, %c2_120, %c0_121] : memref<2x10x10x8xf32, #tpu.memory_space<vmem>>, vector<2x8x8x8xf32>
    %97 = vector.shape_cast %96 : vector<2x8x8x8xf32> to vector<128x8xf32>
    %98 = arith.truncf %97 : vector<128x8xf32> to vector<128x8xbf16>
    %c0_122 = arith.constant 0 : index
    %c40_123 = arith.constant 40 : index
    %99 = vector.load %arg9[%c0_122, %c40_123] : memref<128x72xbf16, #tpu.memory_space<vmem>>, vector<128x8xbf16>
    tpu.vector_store %arg9[%c0_122, %c40_123], %98 {strides = array<i32>} : memref<128x72xbf16, #tpu.memory_space<vmem>>, vector<128x8xbf16>,
    %c0_124 = arith.constant 0 : index
    %c2_125 = arith.constant 2 : index
    %c0_126 = arith.constant 0 : index
    %c0_127 = arith.constant 0 : index
    %100 = vector.load %arg8[%c0_124, %c2_125, %c0_126, %c0_127] : memref<2x10x10x8xf32, #tpu.memory_space<vmem>>, vector<2x8x8x8xf32>
    %101 = vector.shape_cast %100 : vector<2x8x8x8xf32> to vector<128x8xf32>
    %102 = arith.truncf %101 : vector<128x8xf32> to vector<128x8xbf16>
    %c0_128 = arith.constant 0 : index
    %c48_129 = arith.constant 48 : index
    %103 = vector.load %arg9[%c0_128, %c48_129] : memref<128x72xbf16, #tpu.memory_space<vmem>>, vector<128x8xbf16>
    tpu.vector_store %arg9[%c0_128, %c48_129], %102 {strides = array<i32>} : memref<128x72xbf16, #tpu.memory_space<vmem>>, vector<128x8xbf16>,
    %c0_130 = arith.constant 0 : index
    %c2_131 = arith.constant 2 : index
    %c1_132 = arith.constant 1 : index
    %c0_133 = arith.constant 0 : index
    %104 = vector.load %arg8[%c0_130, %c2_131, %c1_132, %c0_133] : memref<2x10x10x8xf32, #tpu.memory_space<vmem>>, vector<2x8x8x8xf32>
    %105 = vector.shape_cast %104 : vector<2x8x8x8xf32> to vector<128x8xf32>
    %106 = arith.truncf %105 : vector<128x8xf32> to vector<128x8xbf16>
    %c0_134 = arith.constant 0 : index
    %c56_135 = arith.constant 56 : index
    %107 = vector.load %arg9[%c0_134, %c56_135] : memref<128x72xbf16, #tpu.memory_space<vmem>>, vector<128x8xbf16>
    tpu.vector_store %arg9[%c0_134, %c56_135], %106 {strides = array<i32>} : memref<128x72xbf16, #tpu.memory_space<vmem>>, vector<128x8xbf16>,
    %c0_136 = arith.constant 0 : index
    %c2_137 = arith.constant 2 : index
    %c2_138 = arith.constant 2 : index
    %c0_139 = arith.constant 0 : index
    %108 = vector.load %arg8[%c0_136, %c2_137, %c2_138, %c0_139] : memref<2x10x10x8xf32, #tpu.memory_space<vmem>>, vector<2x8x8x8xf32>
    %109 = vector.shape_cast %108 : vector<2x8x8x8xf32> to vector<128x8xf32>
    %110 = arith.truncf %109 : vector<128x8xf32> to vector<128x8xbf16>
    %c0_140 = arith.constant 0 : index
    %c64_141 = arith.constant 64 : index
    %111 = vector.load %arg9[%c0_140, %c64_141] : memref<128x72xbf16, #tpu.memory_space<vmem>>, vector<128x8xbf16>
    tpu.vector_store %arg9[%c0_140, %c64_141], %110 {strides = array<i32>} : memref<128x72xbf16, #tpu.memory_space<vmem>>, vector<128x8xbf16>,
    %c0_142 = arith.constant 0 : index
    %c0_143 = arith.constant 0 : index
    %112 = vector.load %arg9[%c0_142, %c0_143] : memref<128x72xbf16, #tpu.memory_space<vmem>>, vector<128x72xbf16>
    %c0_144 = arith.constant 0 : index
    %c0_145 = arith.constant 0 : index
    %113 = vector.load %arg4[%c0_144, %c0_145] : memref<72x8xbf16, #tpu.memory_space<vmem>>, vector<72x8xbf16>
    %cst_146 = arith.constant dense<0.000000e+00> : vector<128x8xf32>
    %114 = tpu.matmul %112, %113, %cst_146 {dimension_numbers = #tpu.dot_dimension_numbers<[1], [0], [0], [1], [0, 0, 1, 1], [], []>} : vector<128x72xbf16>, vector<72x8xbf16>, vector<128x8xf32> -> vector<128x8xf32>
    %c0_147 = arith.constant 0 : index
    %c0_148 = arith.constant 0 : index
    %115 = vector.load %arg5[%c0_147, %c0_148] : memref<1x8xf32, #tpu.memory_space<vmem>>, vector<1x8xf32>
    %c0_149 = arith.constant 0 : index
    %c0_150 = arith.constant 0 : index
    %116 = vector.load %arg6[%c0_149, %c0_150] : memref<1x8xf32, #tpu.memory_space<vmem>>, vector<1x8xf32>
    %cst_151 = arith.constant dense<0.000000e+00> : vector<8xf32>
    %117 = vector.multi_reduction <add>, %114, %cst_151 [0] : vector<128x8xf32> to vector<8xf32>
    %118 = vector.shape_cast %117 : vector<8xf32> to vector<1x8xf32>
    %cst_152 = arith.constant 1.280000e+02 : f32
    %119 = vector.broadcast %cst_152 : f32 to vector<1x8xf32>
    %120 = arith.divf %118, %119 : vector<1x8xf32>
    %121 = arith.mulf %114, %114 : vector<128x8xf32>
    %cst_153 = arith.constant dense<0.000000e+00> : vector<8xf32>
    %122 = vector.multi_reduction <add>, %121, %cst_153 [0] : vector<128x8xf32> to vector<8xf32>
    %123 = vector.shape_cast %122 : vector<8xf32> to vector<1x8xf32>
    %cst_154 = arith.constant 1.280000e+02 : f32
    %124 = vector.broadcast %cst_154 : f32 to vector<1x8xf32>
    %125 = arith.divf %123, %124 : vector<1x8xf32>
    %126 = arith.mulf %120, %120 : vector<1x8xf32>
    %127 = arith.subf %125, %126 : vector<1x8xf32>
    %cst_155 = arith.constant 9.99999974E-6 : f32
    %128 = vector.broadcast %cst_155 : f32 to vector<1x8xf32>
    %129 = arith.addf %127, %128 : vector<1x8xf32>
    %130 = math.rsqrt %129 : vector<1x8xf32>
    %131 = arith.mulf %115, %130 : vector<1x8xf32>
    %132 = arith.mulf %120, %131 : vector<1x8xf32>
    %133 = arith.subf %116, %132 : vector<1x8xf32>
    %134 = vector.broadcast %131 : vector<1x8xf32> to vector<128x8xf32>
    %135 = arith.mulf %114, %134 : vector<128x8xf32>
    %136 = vector.broadcast %133 : vector<1x8xf32> to vector<128x8xf32>
    %137 = arith.addf %135, %136 : vector<128x8xf32>
    %138 = vector.shape_cast %8 : vector<2x8x8x8xf32> to vector<128x8xf32>
    %139 = arith.addf %138, %137 : vector<128x8xf32>
    %cst_156 = arith.constant 0.000000e+00 : f32
    %140 = vector.broadcast %cst_156 : f32 to vector<128x8xf32>
    %141 = arith.maximumf %139, %140 : vector<128x8xf32>
    %142 = vector.shape_cast %141 : vector<128x8xf32> to vector<2x8x8x8xf32>
    %c0_157 = arith.constant 0 : index
    %c0_158 = arith.constant 0 : index
    %c0_159 = arith.constant 0 : index
    %c0_160 = arith.constant 0 : index
    %143 = vector.load %arg7[%c0_157, %c0_158, %c0_159, %c0_160] : memref<2x8x8x8xf32, #tpu.memory_space<vmem>>, vector<2x8x8x8xf32>
    tpu.vector_store %arg7[%c0_157, %c0_158, %c0_159, %c0_160], %142 {strides = array<i32>} : memref<2x8x8x8xf32, #tpu.memory_space<vmem>>, vector<2x8x8x8xf32>,
    return
  }
}

</mosaic_0001>

<llo_original>
// kernel: tpu_custom_call.1
$region0: #{tpu_custom_call.1}
  #allocation0 [shape = 'u32[]', space=smem, size = 0x4, offset = 0x4, fixed_abs, tag = 'smem constant byte address 0x4 - core index']
  #allocation1 [shape = 'u32[72,128]{1,0:T(1,128)}', space=vmem, size = 0x9000, scoped, tag = 'internal scratch']
  #allocation2 [shape = 'f32[2,10,10,8]{3,2,1,0:T(8,128)}', space=vmem, size = 0x28000, scoped, tag = 'scratch operand']
  #allocation3 [shape = 'bf16[128,72]{1,0:T(8,128)(2,1)}', space=vmem, size = 0x8000, scoped, tag = 'scratch operand']
  %s0 = inlined_call_operand.hbm [shape: f32[2,8,8,8], index: 0, kind: input, shape index: {}]
  %s1 = inlined_call_operand.vmem [shape: bf16[72,8], index: 1, kind: input, shape index: {}]
  %s2 = inlined_call_operand.vmem [shape: f32[1,8], index: 2, kind: input, shape index: {}]
  %s3 = inlined_call_operand.vmem [shape: f32[1,8], index: 3, kind: input, shape index: {}]
  %s4 = inlined_call_operand.vmem [shape: bf16[72,8], index: 4, kind: input, shape index: {}]
  %s5 = inlined_call_operand.vmem [shape: f32[1,8], index: 5, kind: input, shape index: {}]
  %s6 = inlined_call_operand.vmem [shape: f32[1,8], index: 6, kind: input, shape index: {}]
  %s7 = inlined_call_operand.hbm [shape: f32[2,8,8,8], index: 7, kind: output, shape index: {}]
  %s8 = sld [smem:[#allocation0]]
  $region42: #{tpu_custom_call.1} parent=0
    _
  %s10 = ssub.s32 1, %s8
  %s11 = scalar_select 0, %s10, %s8
  $region1: #{tpu_custom_call.1} parent=0
    #allocation4 [shape = 'u8[65536]{0}', space=vmem, size = 0x10000, scoped, tag = 'input window, operand 0, single buffered']
    #allocation5 [shape = 's32[1]{0}', space=sflag, size = 0x4, scoped, tag = 'scoped memory for tpu_custom_call.1']
    #allocation6 [shape = 's32[1]{0}', space=sflag, size = 0x4, scoped, tag = 'scoped memory for tpu_custom_call.1']
    #allocation7 [shape = 'u8[65536]{0}', space=vmem, size = 0x10000, scoped, tag = 'output window, operand 0, single buffered']
    %12 = vsyncpa [#allocation5], 0
    %13 = vsyncpa [#allocation6], 0
    // Predicated region
    $region2: #{tpu_custom_call.1} parent=1 // pred_check
      _
    $region3: #{tpu_custom_call.1} parent=1 // pred_check_branch
      %15 = sbr.rel (0) target = $region5
    $region4: #{tpu_custom_call.1} parent=1 // pred_region
      %17 = vsyncadd [#allocation5], 0
      %s18 = sshll.u32 %s0, 4
      %s19 = int_to_ptr.hbm [resolvable:$true] %s18
      %s20 = sshll.u32 [#allocation4], 4
      %s21 = int_to_ptr.vmem [resolvable:$true] %s20
      %26 = dma.hbm_to_vmem [thread:$0]  %s19, 2048, %s21, [#allocation5], 128, 128, 8
    $region5: #{tpu_custom_call.1} parent=1 // pred_fallthru
      _
    // Predicated region
    $region6: #{tpu_custom_call.1} parent=1 // pred_check
      _
    $region7: #{tpu_custom_call.1} parent=1 // pred_check_branch
      %28 = sbr.rel (0) target = $region9
    $region8: #{tpu_custom_call.1} parent=1 // pred_region
      _
    $region9: #{tpu_custom_call.1} parent=1 // pred_fallthru
      _
    // Predicated region
    $region10: #{tpu_custom_call.1} parent=1 // pred_check
      _
    $region11: #{tpu_custom_call.1} parent=1 // pred_check_branch
      %30 = sbr.rel (0) target = $region13
    $region12: #{tpu_custom_call.1} parent=1 // pred_region
      _
    $region13: #{tpu_custom_call.1} parent=1 // pred_fallthru
      _
    // Predicated region
    $region14: #{tpu_custom_call.1} parent=1 // pred_check
      _
    $region15: #{tpu_custom_call.1} parent=1 // pred_check_branch
      %32 = sbr.rel (0) target = $region17
    $region16: #{tpu_custom_call.1} parent=1 // pred_region
      _
    $region17: #{tpu_custom_call.1} parent=1 // pred_fallthru
      _
    // Predicated region
    $region18: #{tpu_custom_call.1} parent=1 // pred_check
      _
    $region19: #{tpu_custom_call.1} parent=1 // pred_check_branch
      %34 = sbr.rel (0) target = $region21
    $region20: #{tpu_custom_call.1} parent=1 // pred_region
      _
    $region21: #{tpu_custom_call.1} parent=1 // pred_fallthru
      _
    // Predicated region
    $region22: #{tpu_custom_call.1} parent=1 // pred_check
      _
    $region23: #{tpu_custom_call.1} parent=1 // pred_check_branch
      %36 = sbr.rel (0) target = $region25
    $region24: #{tpu_custom_call.1} parent=1 // pred_region
      _
    $region25: #{tpu_custom_call.1} parent=1 // pred_fallthru
      _
    // Predicated region
    $region26: #{tpu_custom_call.1} parent=1 // pred_check
      _
    $region27: #{tpu_custom_call.1} parent=1 // pred_check_branch
      %38 = sbr.rel (0) target = $region29
    $region28: #{tpu_custom_call.1} parent=1 // pred_region
      _
    $region29: #{tpu_custom_call.1} parent=1 // pred_fallthru
      _
    // Predicated region
    $region30: #{tpu_custom_call.1} parent=1 // pred_check
      _
    $region31: #{tpu_custom_call.1} parent=1 // pred_check_branch
      %40 = sbr.rel (0) target = $region33
    $region32: #{tpu_custom_call.1} parent=1 // pred_region
      %42 = dma.done [#allocation5], 2048
    $region33: #{tpu_custom_call.1} parent=1 // pred_fallthru
      _
    %vm44 = vcmask 64512
    %45 = vst.msk [vmem:[#allocation2] sm:$0xff] %vm44, 0.0
    %vm46 = vcmask 58368
    %47 = vst.msk [vmem:[#allocation2 + $0x8] sm:$0x3] %vm46, 0.0
    %48 = vst.msk [vmem:[#allocation2 + $0xa0] sm:$0xff] %vm44, 0.0
    %49 = vst.msk [vmem:[#allocation2 + $0xa8] sm:$0x3] %vm46, 0.0
    %s50 = scalar_lea.vmem [#allocation2], 144
    %51 = vst.msk [vmem:[%s50] sm:$0xff] %vm44, 0.0
    %52 = vst.msk [vmem:[%s50 + $0x8] sm:$0x3] %vm46, 0.0
    %53 = vst.msk [vmem:[%s50 + $0xa0] sm:$0xff] %vm44, 0.0
    %54 = vst.msk [vmem:[%s50 + $0xa8] sm:$0x3] %vm46, 0.0
    %vm55 = vcmask 57344
    %56 = vst.msk [vmem:[#allocation2] sm:$0x1] %vm55, 0.0
    %57 = vst.msk [vmem:[#allocation2 + $0x10] sm:$0x1] %vm55, 0.0
    %58 = vst.msk [vmem:[#allocation2 + $0x20] sm:$0x1] %vm55, 0.0
    %59 = vst.msk [vmem:[#allocation2 + $0x30] sm:$0x1] %vm55, 0.0
    %60 = vst.msk [vmem:[#allocation2 + $0x40] sm:$0x1] %vm55, 0.0
    %61 = vst.msk [vmem:[#allocation2 + $0x50] sm:$0x1] %vm55, 0.0
    %62 = vst.msk [vmem:[#allocation2 + $0x60] sm:$0x1] %vm55, 0.0
    %63 = vst.msk [vmem:[#allocation2 + $0x70] sm:$0x1] %vm55, 0.0
    %64 = vst.msk [vmem:[#allocation2 + $0x80] sm:$0x1] %vm55, 0.0
    %65 = vst.msk [vmem:[#allocation2 + $0x90] sm:$0x1] %vm55, 0.0
    %66 = vst.msk [vmem:[#allocation2 + $0xa0] sm:$0x1] %vm55, 0.0
    %67 = vst.msk [vmem:[#allocation2 + $0xb0] sm:$0x1] %vm55, 0.0
    %68 = vst.msk [vmem:[#allocation2 + $0xc0] sm:$0x1] %vm55, 0.0
    %69 = vst.msk [vmem:[#allocation2 + $0xd0] sm:$0x1] %vm55, 0.0
    %70 = vst.msk [vmem:[#allocation2 + $0xe0] sm:$0x1] %vm55, 0.0
    %71 = vst.msk [vmem:[#allocation2 + $0xf0] sm:$0x1] %vm55, 0.0
    %72 = vst.msk [vmem:[#allocation2 + $0x100] sm:$0x1] %vm55, 0.0
    %73 = vst.msk [vmem:[#allocation2 + $0x110] sm:$0x1] %vm55, 0.0
    %74 = vst.msk [vmem:[#allocation2 + $0x120] sm:$0x1] %vm55, 0.0
    %75 = vst.msk [vmem:[#allocation2 + $0x130] sm:$0x1] %vm55, 0.0
    %76 = vst.msk [vmem:[#allocation2 + $0x9] sm:$0x1] %vm55, 0.0
    %77 = vst.msk [vmem:[#allocation2 + $0x19] sm:$0x1] %vm55, 0.0
    %78 = vst.msk [vmem:[#allocation2 + $0x29] sm:$0x1] %vm55, 0.0
    %79 = vst.msk [vmem:[#allocation2 + $0x39] sm:$0x1] %vm55, 0.0
    %80 = vst.msk [vmem:[#allocation2 + $0x49] sm:$0x1] %vm55, 0.0
    %81 = vst.msk [vmem:[#allocation2 + $0x59] sm:$0x1] %vm55, 0.0
    %82 = vst.msk [vmem:[#allocation2 + $0x69] sm:$0x1] %vm55, 0.0
    %83 = vst.msk [vmem:[#allocation2 + $0x79] sm:$0x1] %vm55, 0.0
    %84 = vst.msk [vmem:[#allocation2 + $0x89] sm:$0x1] %vm55, 0.0
    %85 = vst.msk [vmem:[#allocation2 + $0x99] sm:$0x1] %vm55, 0.0
    %86 = vst.msk [vmem:[#allocation2 + $0xa9] sm:$0x1] %vm55, 0.0
    %87 = vst.msk [vmem:[#allocation2 + $0xb9] sm:$0x1] %vm55, 0.0
    %88 = vst.msk [vmem:[#allocation2 + $0xc9] sm:$0x1] %vm55, 0.0
    %89 = vst.msk [vmem:[#allocation2 + $0xd9] sm:$0x1] %vm55, 0.0
    %90 = vst.msk [vmem:[#allocation2 + $0xe9] sm:$0x1] %vm55, 0.0
    %91 = vst.msk [vmem:[#allocation2 + $0xf9] sm:$0x1] %vm55, 0.0
    %92 = vst.msk [vmem:[#allocation2 + $0x109] sm:$0x1] %vm55, 0.0
    %93 = vst.msk [vmem:[#allocation2 + $0x119] sm:$0x1] %vm55, 0.0
    %94 = vst.msk [vmem:[#allocation2 + $0x129] sm:$0x1] %vm55, 0.0
    %95 = vst.msk [vmem:[#allocation2 + $0x139] sm:$0x1] %vm55, 0.0
    %v96 = vld [vmem:[#allocation4] sm:$0xff]
    %v97 = vld [vmem:[#allocation4 + $0x8] sm:$0xff]
    %v98 = vld [vmem:[#allocation4 + $0x10] sm:$0xff]
    %v99 = vld [vmem:[#allocation4 + $0x18] sm:$0xff]
    %v100 = vld [vmem:[#allocation4 + $0x20] sm:$0xff]
    %v101 = vld [vmem:[#allocation4 + $0x28] sm:$0xff]
    %v102 = vld [vmem:[#allocation4 + $0x30] sm:$0xff]
    %v103 = vld [vmem:[#allocation4 + $0x38] sm:$0xff]
    %v104 = vld [vmem:[#allocation4 + $0x40] sm:$0xff]
    %v105 = vld [vmem:[#allocation4 + $0x48] sm:$0xff]
    %v106 = vld [vmem:[#allocation4 + $0x50] sm:$0xff]
    %v107 = vld [vmem:[#allocation4 + $0x58] sm:$0xff]
    %v108 = vld [vmem:[#allocation4 + $0x60] sm:$0xff]
    %v109 = vld [vmem:[#allocation4 + $0x68] sm:$0xff]
    %v110 = vld [vmem:[#allocation4 + $0x70] sm:$0xff]
    %v111 = vld [vmem:[#allocation4 + $0x78] sm:$0xff]
    %s112 = scalar_lea.vmem [#allocation2], 16
    %113 = vst.msk [vmem:[%s112 + $0x1] sm:$0xff] %vm44, %v96
    %114 = vst.msk [vmem:[%s112 + $0x11] sm:$0xff] %vm44, %v97
    %115 = vst.msk [vmem:[%s112 + $0x21] sm:$0xff] %vm44, %v98
    %116 = vst.msk [vmem:[%s112 + $0x31] sm:$0xff] %vm44, %v99
    %117 = vst.msk [vmem:[%s112 + $0x41] sm:$0xff] %vm44, %v100
    %118 = vst.msk [vmem:[%s112 + $0x51] sm:$0xff] %vm44, %v101
    %119 = vst.msk [vmem:[%s112 + $0x61] sm:$0xff] %vm44, %v102
    %120 = vst.msk [vmem:[%s112 + $0x71] sm:$0xff] %vm44, %v103
    %121 = vst.msk [vmem:[%s112 + $0xa1] sm:$0xff] %vm44, %v104
    %122 = vst.msk [vmem:[%s112 + $0xb1] sm:$0xff] %vm44, %v105
    %123 = vst.msk [vmem:[%s112 + $0xc1] sm:$0xff] %vm44, %v106
    %124 = vst.msk [vmem:[%s112 + $0xd1] sm:$0xff] %vm44, %v107
    %125 = vst.msk [vmem:[%s112 + $0xe1] sm:$0xff] %vm44, %v108
    %126 = vst.msk [vmem:[%s112 + $0xf1] sm:$0xff] %vm44, %v109
    %127 = vst.msk [vmem:[%s112 + $0x101] sm:$0xff] %vm44, %v110
    %128 = vst.msk [vmem:[%s112 + $0x111] sm:$0xff] %vm44, %v111
    %v129 = vld [vmem:[#allocation2] sm:$0xff]
    %v130 = vld [vmem:[#allocation2 + $0x10] sm:$0xff]
    %v131 = vld [vmem:[#allocation2 + $0x20] sm:$0xff]
    %v132 = vld [vmem:[#allocation2 + $0x30] sm:$0xff]
    %v133 = vld [vmem:[#allocation2 + $0x40] sm:$0xff]
    %v134 = vld [vmem:[#allocation2 + $0x50] sm:$0xff]
    %v135 = vld [vmem:[#allocation2 + $0x60] sm:$0xff]
    %v136 = vld [vmem:[#allocation2 + $0x70] sm:$0xff]
    %v137 = vld [vmem:[#allocation2 + $0xa0] sm:$0xff]
    %v138 = vld [vmem:[#allocation2 + $0xb0] sm:$0xff]
    %v139 = vld [vmem:[#allocation2 + $0xc0] sm:$0xff]
    %v140 = vld [vmem:[#allocation2 + $0xd0] sm:$0xff]
    %v141 = vld [vmem:[#allocation2 + $0xe0] sm:$0xff]
    %v142 = vld [vmem:[#allocation2 + $0xf0] sm:$0xff]
    %v143 = vld [vmem:[#allocation2 + $0x100] sm:$0xff]
    %v144 = vld [vmem:[#allocation2 + $0x110] sm:$0xff]
    %v145 = vpack.c.bf16 %v129, %v129
    %v146 = vpack.c.bf16 %v130, %v130
    %v147 = vpack.c.bf16 %v131, %v131
    %v148 = vpack.c.bf16 %v132, %v132
    %v149 = vpack.c.bf16 %v133, %v133
    %v150 = vpack.c.bf16 %v134, %v134
    %v151 = vpack.c.bf16 %v135, %v135
    %v152 = vpack.c.bf16 %v136, %v136
    %v153 = vpack.c.bf16 %v137, %v137
    %v154 = vpack.c.bf16 %v138, %v138
    %v155 = vpack.c.bf16 %v139, %v139
    %v156 = vpack.c.bf16 %v140, %v140
    %v157 = vpack.c.bf16 %v141, %v141
    %v158 = vpack.c.bf16 %v142, %v142
    %v159 = vpack.c.bf16 %v143, %v143
    %v160 = vpack.c.bf16 %v144, %v144
    %vm161 = vcmask 60416
    %162 = vst.msk [vmem:[#allocation3] sm:$0xf] %vm161, %v145
    %163 = vst.msk [vmem:[#allocation3 + $0x4] sm:$0xf] %vm161, %v146
    %164 = vst.msk [vmem:[#allocation3 + $0x8] sm:$0xf] %vm161, %v147
    %165 = vst.msk [vmem:[#allocation3 + $0xc] sm:$0xf] %vm161, %v148
    %166 = vst.msk [vmem:[#allocation3 + $0x10] sm:$0xf] %vm161, %v149
    %167 = vst.msk [vmem:[#allocation3 + $0x14] sm:$0xf] %vm161, %v150
    %168 = vst.msk [vmem:[#allocation3 + $0x18] sm:$0xf] %vm161, %v151
    %169 = vst.msk [vmem:[#allocation3 + $0x1c] sm:$0xf] %vm161, %v152
    %170 = vst.msk [vmem:[#allocation3 + $0x20] sm:$0xf] %vm161, %v153
    %171 = vst.msk [vmem:[#allocation3 + $0x24] sm:$0xf] %vm161, %v154
    %172 = vst.msk [vmem:[#allocation3 + $0x28] sm:$0xf] %vm161, %v155
    %173 = vst.msk [vmem:[#allocation3 + $0x2c] sm:$0xf] %vm161, %v156
    %174 = vst.msk [vmem:[#allocation3 + $0x30] sm:$0xf] %vm161, %v157
    %175 = vst.msk [vmem:[#allocation3 + $0x34] sm:$0xf] %vm161, %v158
    %176 = vst.msk [vmem:[#allocation3 + $0x38] sm:$0xf] %vm161, %v159
    %177 = vst.msk [vmem:[#allocation3 + $0x3c] sm:$0xf] %vm161, %v160
    %v178 = vld [vmem:[#allocation2 + $0x1] sm:$0xff]
    %v179 = vld [vmem:[#allocation2 + $0x11] sm:$0xff]
    %v180 = vld [vmem:[#allocation2 + $0x21] sm:$0xff]
    %v181 = vld [vmem:[#allocation2 + $0x31] sm:$0xff]
    %v182 = vld [vmem:[#allocation2 + $0x41] sm:$0xff]
    %v183 = vld [vmem:[#allocation2 + $0x51] sm:$0xff]
    %v184 = vld [vmem:[#allocation2 + $0x61] sm:$0xff]
    %v185 = vld [vmem:[#allocation2 + $0x71] sm:$0xff]
    %v186 = vld [vmem:[#allocation2 + $0xa1] sm:$0xff]
    %v187 = vld [vmem:[#allocation2 + $0xb1] sm:$0xff]
    %v188 = vld [vmem:[#allocation2 + $0xc1] sm:$0xff]
    %v189 = vld [vmem:[#allocation2 + $0xd1] sm:$0xff]
    %v190 = vld [vmem:[#allocation2 + $0xe1] sm:$0xff]
    %v191 = vld [vmem:[#allocation2 + $0xf1] sm:$0xff]
    %v192 = vld [vmem:[#allocation2 + $0x101] sm:$0xff]
    %v193 = vld [vmem:[#allocation2 + $0x111] sm:$0xff]
    %v194 = vpack.c.bf16 %v178, %v178
    %v195 = vpack.c.bf16 %v179, %v179
    %v196 = vpack.c.bf16 %v180, %v180
    %v197 = vpack.c.bf16 %v181, %v181
    %v198 = vpack.c.bf16 %v182, %v182
    %v199 = vpack.c.bf16 %v183, %v183
    %v200 = vpack.c.bf16 %v184, %v184
    %v201 = vpack.c.bf16 %v185, %v185
    %v202 = vpack.c.bf16 %v186, %v186
    %v203 = vpack.c.bf16 %v187, %v187
    %v204 = vpack.c.bf16 %v188, %v188
    %v205 = vpack.c.bf16 %v189, %v189
    %v206 = vpack.c.bf16 %v190, %v190
    %v207 = vpack.c.bf16 %v191, %v191
    %v208 = vpack.c.bf16 %v192, %v192
    %v209 = vpack.c.bf16 %v193, %v193
    %226 = vrot.lane.b32.xlu0 %v194, 8
    %v227 = vpop.permute.xlu0 %226
    %228 = vrot.lane.b32.xlu0 %v195, 8
    %v229 = vpop.permute.xlu0 %228
    %230 = vrot.lane.b32.xlu0 %v196, 8
    %v231 = vpop.permute.xlu0 %230
    %232 = vrot.lane.b32.xlu0 %v197, 8
    %v233 = vpop.permute.xlu0 %232
    %234 = vrot.lane.b32.xlu0 %v198, 8
    %v235 = vpop.permute.xlu0 %234
    %236 = vrot.lane.b32.xlu0 %v199, 8
    %v237 = vpop.permute.xlu0 %236
    %238 = vrot.lane.b32.xlu0 %v200, 8
    %v239 = vpop.permute.xlu0 %238
    %240 = vrot.lane.b32.xlu0 %v201, 8
    %v241 = vpop.permute.xlu0 %240
    %242 = vrot.lane.b32.xlu0 %v202, 8
    %v243 = vpop.permute.xlu0 %242
    %244 = vrot.lane.b32.xlu0 %v203, 8
    %v245 = vpop.permute.xlu0 %244
    %246 = vrot.lane.b32.xlu0 %v204, 8
    %v247 = vpop.permute.xlu0 %246
    %248 = vrot.lane.b32.xlu0 %v205, 8
    %v249 = vpop.permute.xlu0 %248
    %250 = vrot.lane.b32.xlu0 %v206, 8
    %v251 = vpop.permute.xlu0 %250
    %252 = vrot.lane.b32.xlu0 %v207, 8
    %v253 = vpop.permute.xlu0 %252
    %254 = vrot.lane.b32.xlu0 %v208, 8
    %v255 = vpop.permute.xlu0 %254
    %256 = vrot.lane.b32.xlu0 %v209, 8
    %v257 = vpop.permute.xlu0 %256
    %vm274 = vcmask 126016
    %275 = vst.msk [vmem:[#allocation3] sm:$0xf] %vm274, %v227
    %276 = vst.msk [vmem:[#allocation3 + $0x4] sm:$0xf] %vm274, %v229
    %277 = vst.msk [vmem:[#allocation3 + $0x8] sm:$0xf] %vm274, %v231
    %278 = vst.msk [vmem:[#allocation3 + $0xc] sm:$0xf] %vm274, %v233
    %279 = vst.msk [vmem:[#allocation3 + $0x10] sm:$0xf] %vm274, %v235
    %280 = vst.msk [vmem:[#allocation3 + $0x14] sm:$0xf] %vm274, %v237
    %281 = vst.msk [vmem:[#allocation3 + $0x18] sm:$0xf] %vm274, %v239
    %282 = vst.msk [vmem:[#allocation3 + $0x1c] sm:$0xf] %vm274, %v241
    %283 = vst.msk [vmem:[#allocation3 + $0x20] sm:$0xf] %vm274, %v243
    %284 = vst.msk [vmem:[#allocation3 + $0x24] sm:$0xf] %vm274, %v245
    %285 = vst.msk [vmem:[#allocation3 + $0x28] sm:$0xf] %vm274, %v247
    %286 = vst.msk [vmem:[#allocation3 + $0x2c] sm:$0xf] %vm274, %v249
    %287 = vst.msk [vmem:[#allocation3 + $0x30] sm:$0xf] %vm274, %v251
    %288 = vst.msk [vmem:[#allocation3 + $0x34] sm:$0xf] %vm274, %v253
    %289 = vst.msk [vmem:[#allocation3 + $0x38] sm:$0xf] %vm274, %v255
    %290 = vst.msk [vmem:[#allocation3 + $0x3c] sm:$0xf] %vm274, %v257
    %v291 = vld [vmem:[#allocation2 + $0x2] sm:$0xff]
    %v292 = vld [vmem:[#allocation2 + $0x12] sm:$0xff]
    %v293 = vld [vmem:[#allocation2 + $0x22] sm:$0xff]
    %v294 = vld [vmem:[#allocation2 + $0x32] sm:$0xff]
    %v295 = vld [vmem:[#allocation2 + $0x42] sm:$0xff]
    %v296 = vld [vmem:[#allocation2 + $0x52] sm:$0xff]
    %v297 = vld [vmem:[#allocation2 + $0x62] sm:$0xff]
    %v298 = vld [vmem:[#allocation2 + $0x72] sm:$0xff]
    %v299 = vld [vmem:[#allocation2 + $0xa2] sm:$0xff]
    %v300 = vld [vmem:[#allocation2 + $0xb2] sm:$0xff]
    %v301 = vld [vmem:[#allocation2 + $0xc2] sm:$0xff]
    %v302 = vld [vmem:[#allocation2 + $0xd2] sm:$0xff]
    %v303 = vld [vmem:[#allocation2 + $0xe2] sm:$0xff]
    %v304 = vld [vmem:[#allocation2 + $0xf2] sm:$0xff]
    %v305 = vld [vmem:[#allocation2 + $0x102] sm:$0xff]
    %v306 = vld [vmem:[#allocation2 + $0x112] sm:$0xff]
    %v307 = vpack.c.bf16 %v291, %v291
    %v308 = vpack.c.bf16 %v292, %v292
    %v309 = vpack.c.bf16 %v293, %v293
    %v310 = vpack.c.bf16 %v294, %v294
    %v311 = vpack.c.bf16 %v295, %v295
    %v312 = vpack.c.bf16 %v296, %v296
    %v313 = vpack.c.bf16 %v297, %v297
    %v314 = vpack.c.bf16 %v298, %v298
    %v315 = vpack.c.bf16 %v299, %v299
    %v316 = vpack.c.bf16 %v300, %v300
    %v317 = vpack.c.bf16 %v301, %v301
    %v318 = vpack.c.bf16 %v302, %v302
    %v319 = vpack.c.bf16 %v303, %v303
    %v320 = vpack.c.bf16 %v304, %v304
    %v321 = vpack.c.bf16 %v305, %v305
    %v322 = vpack.c.bf16 %v306, %v306
    %339 = vrot.lane.b32.xlu0 %v307, 16
    %v340 = vpop.permute.xlu0 %339
    %341 = vrot.lane.b32.xlu0 %v308, 16
    %v342 = vpop.permute.xlu0 %341
    %343 = vrot.lane.b32.xlu0 %v309, 16
    %v344 = vpop.permute.xlu0 %343
    %345 = vrot.lane.b32.xlu0 %v310, 16
    %v346 = vpop.permute.xlu0 %345
    %347 = vrot.lane.b32.xlu0 %v311, 16
    %v348 = vpop.permute.xlu0 %347
    %349 = vrot.lane.b32.xlu0 %v312, 16
    %v350 = vpop.permute.xlu0 %349
    %351 = vrot.lane.b32.xlu0 %v313, 16
    %v352 = vpop.permute.xlu0 %351
    %353 = vrot.lane.b32.xlu0 %v314, 16
    %v354 = vpop.permute.xlu0 %353
    %355 = vrot.lane.b32.xlu0 %v315, 16
    %v356 = vpop.permute.xlu0 %355
    %357 = vrot.lane.b32.xlu0 %v316, 16
    %v358 = vpop.permute.xlu0 %357
    %359 = vrot.lane.b32.xlu0 %v317, 16
    %v360 = vpop.permute.xlu0 %359
    %361 = vrot.lane.b32.xlu0 %v318, 16
    %v362 = vpop.permute.xlu0 %361
    %363 = vrot.lane.b32.xlu0 %v319, 16
    %v364 = vpop.permute.xlu0 %363
    %365 = vrot.lane.b32.xlu0 %v320, 16
    %v366 = vpop.permute.xlu0 %365
    %367 = vrot.lane.b32.xlu0 %v321, 16
    %v368 = vpop.permute.xlu0 %367
    %369 = vrot.lane.b32.xlu0 %v322, 16
    %v370 = vpop.permute.xlu0 %369
    %vm387 = vcmask 191616
    %388 = vst.msk [vmem:[#allocation3] sm:$0xf] %vm387, %v340
    %389 = vst.msk [vmem:[#allocation3 + $0x4] sm:$0xf] %vm387, %v342
    %390 = vst.msk [vmem:[#allocation3 + $0x8] sm:$0xf] %vm387, %v344
    %391 = vst.msk [vmem:[#allocation3 + $0xc] sm:$0xf] %vm387, %v346
    %392 = vst.msk [vmem:[#allocation3 + $0x10] sm:$0xf] %vm387, %v348
    %393 = vst.msk [vmem:[#allocation3 + $0x14] sm:$0xf] %vm387, %v350
    %394 = vst.msk [vmem:[#allocation3 + $0x18] sm:$0xf] %vm387, %v352
    %395 = vst.msk [vmem:[#allocation3 + $0x1c] sm:$0xf] %vm387, %v354
    %396 = vst.msk [vmem:[#allocation3 + $0x20] sm:$0xf] %vm387, %v356
    %397 = vst.msk [vmem:[#allocation3 + $0x24] sm:$0xf] %vm387, %v358
    %398 = vst.msk [vmem:[#allocation3 + $0x28] sm:$0xf] %vm387, %v360
    %399 = vst.msk [vmem:[#allocation3 + $0x2c] sm:$0xf] %vm387, %v362
    %400 = vst.msk [vmem:[#allocation3 + $0x30] sm:$0xf] %vm387, %v364
    %401 = vst.msk [vmem:[#allocation3 + $0x34] sm:$0xf] %vm387, %v366
    %402 = vst.msk [vmem:[#allocation3 + $0x38] sm:$0xf] %vm387, %v368
    %403 = vst.msk [vmem:[#allocation3 + $0x3c] sm:$0xf] %vm387, %v370
    %v404 = vld [vmem:[%s112] sm:$0xff]
    %v405 = vld [vmem:[%s112 + $0x10] sm:$0xff]
    %v406 = vld [vmem:[%s112 + $0x20] sm:$0xff]
    %v407 = vld [vmem:[%s112 + $0x30] sm:$0xff]
    %v408 = vld [vmem:[%s112 + $0x40] sm:$0xff]
    %v409 = vld [vmem:[%s112 + $0x50] sm:$0xff]
    %v410 = vld [vmem:[%s112 + $0x60] sm:$0xff]
    %v411 = vld [vmem:[%s112 + $0x70] sm:$0xff]
    %v412 = vld [vmem:[%s112 + $0xa0] sm:$0xff]
    %v413 = vld [vmem:[%s112 + $0xb0] sm:$0xff]
    %v414 = vld [vmem:[%s112 + $0xc0] sm:$0xff]
    %v415 = vld [vmem:[%s112 + $0xd0] sm:$0xff]
    %v416 = vld [vmem:[%s112 + $0xe0] sm:$0xff]
    %v417 = vld [vmem:[%s112 + $0xf0] sm:$0xff]
    %v418 = vld [vmem:[%s112 + $0x100] sm:$0xff]
    %v419 = vld [vmem:[%s112 + $0x110] sm:$0xff]
    %v420 = vpack.c.bf16 %v404, %v404
    %v421 = vpack.c.bf16 %v405, %v405
    %v422 = vpack.c.bf16 %v406, %v406
    %v423 = vpack.c.bf16 %v407, %v407
    %v424 = vpack.c.bf16 %v408, %v408
    %v425 = vpack.c.bf16 %v409, %v409
    %v426 = vpack.c.bf16 %v410, %v410
    %v427 = vpack.c.bf16 %v411, %v411
    %v428 = vpack.c.bf16 %v412, %v412
    %v429 = vpack.c.bf16 %v413, %v413
    %v430 = vpack.c.bf16 %v414, %v414
    %v431 = vpack.c.bf16 %v415, %v415
    %v432 = vpack.c.bf16 %v416, %v416
    %v433 = vpack.c.bf16 %v417, %v417
    %v434 = vpack.c.bf16 %v418, %v418
    %v435 = vpack.c.bf16 %v419, %v419
    %452 = vrot.lane.b32.xlu0 %v420, 24
    %v453 = vpop.permute.xlu0 %452
    %454 = vrot.lane.b32.xlu0 %v421, 24
    %v455 = vpop.permute.xlu0 %454
    %456 = vrot.lane.b32.xlu0 %v422, 24
    %v457 = vpop.permute.xlu0 %456
    %458 = vrot.lane.b32.xlu0 %v423, 24
    %v459 = vpop.permute.xlu0 %458
    %460 = vrot.lane.b32.xlu0 %v424, 24
    %v461 = vpop.permute.xlu0 %460
    %462 = vrot.lane.b32.xlu0 %v425, 24
    %v463 = vpop.permute.xlu0 %462
    %464 = vrot.lane.b32.xlu0 %v426, 24
    %v465 = vpop.permute.xlu0 %464
    %466 = vrot.lane.b32.xlu0 %v427, 24
    %v467 = vpop.permute.xlu0 %466
    %468 = vrot.lane.b32.xlu0 %v428, 24
    %v469 = vpop.permute.xlu0 %468
    %470 = vrot.lane.b32.xlu0 %v429, 24
    %v471 = vpop.permute.xlu0 %470
    %472 = vrot.lane.b32.xlu0 %v430, 24
    %v473 = vpop.permute.xlu0 %472
    %474 = vrot.lane.b32.xlu0 %v431, 24
    %v475 = vpop.permute.xlu0 %474
    %476 = vrot.lane.b32.xlu0 %v432, 24
    %v477 = vpop.permute.xlu0 %476
    %478 = vrot.lane.b32.xlu0 %v433, 24
    %v479 = vpop.permute.xlu0 %478
    %480 = vrot.lane.b32.xlu0 %v434, 24
    %v481 = vpop.permute.xlu0 %480
    %482 = vrot.lane.b32.xlu0 %v435, 24
    %v483 = vpop.permute.xlu0 %482
    %vm500 = vcmask 257216
    %501 = vst.msk [vmem:[#allocation3] sm:$0xf] %vm500, %v453
    %502 = vst.msk [vmem:[#allocation3 + $0x4] sm:$0xf] %vm500, %v455
    %503 = vst.msk [vmem:[#allocation3 + $0x8] sm:$0xf] %vm500, %v457
    %504 = vst.msk [vmem:[#allocation3 + $0xc] sm:$0xf] %vm500, %v459
    %505 = vst.msk [vmem:[#allocation3 + $0x10] sm:$0xf] %vm500, %v461
    %506 = vst.msk [vmem:[#allocation3 + $0x14] sm:$0xf] %vm500, %v463
    %507 = vst.msk [vmem:[#allocation3 + $0x18] sm:$0xf] %vm500, %v465
    %508 = vst.msk [vmem:[#allocation3 + $0x1c] sm:$0xf] %vm500, %v467
    %509 = vst.msk [vmem:[#allocation3 + $0x20] sm:$0xf] %vm500, %v469
    %510 = vst.msk [vmem:[#allocation3 + $0x24] sm:$0xf] %vm500, %v471
    %511 = vst.msk [vmem:[#allocation3 + $0x28] sm:$0xf] %vm500, %v473
    %512 = vst.msk [vmem:[#allocation3 + $0x2c] sm:$0xf] %vm500, %v475
    %513 = vst.msk [vmem:[#allocation3 + $0x30] sm:$0xf] %vm500, %v477
    %514 = vst.msk [vmem:[#allocation3 + $0x34] sm:$0xf] %vm500, %v479
    %515 = vst.msk [vmem:[#allocation3 + $0x38] sm:$0xf] %vm500, %v481
    %516 = vst.msk [vmem:[#allocation3 + $0x3c] sm:$0xf] %vm500, %v483
    %v517 = vld [vmem:[%s112 + $0x1] sm:$0xff]
    %v518 = vld [vmem:[%s112 + $0x11] sm:$0xff]
    %v519 = vld [vmem:[%s112 + $0x21] sm:$0xff]
    %v520 = vld [vmem:[%s112 + $0x31] sm:$0xff]
    %v521 = vld [vmem:[%s112 + $0x41] sm:$0xff]
    %v522 = vld [vmem:[%s112 + $0x51] sm:$0xff]
    %v523 = vld [vmem:[%s112 + $0x61] sm:$0xff]
    %v524 = vld [vmem:[%s112 + $0x71] sm:$0xff]
    %v525 = vld [vmem:[%s112 + $0xa1] sm:$0xff]
    %v526 = vld [vmem:[%s112 + $0xb1] sm:$0xff]
    %v527 = vld [vmem:[%s112 + $0xc1] sm:$0xff]
    %v528 = vld [vmem:[%s112 + $0xd1] sm:$0xff]
    %v529 = vld [vmem:[%s112 + $0xe1] sm:$0xff]
    %v530 = vld [vmem:[%s112 + $0xf1] sm:$0xff]
    %v531 = vld [vmem:[%s112 + $0x101] sm:$0xff]
    %v532 = vld [vmem:[%s112 + $0x111] sm:$0xff]
    %v533 = vpack.c.bf16 %v517, %v517
    %v534 = vpack.c.bf16 %v518, %v518
    %v535 = vpack.c.bf16 %v519, %v519
    %v536 = vpack.c.bf16 %v520, %v520
    %v537 = vpack.c.bf16 %v521, %v521
    %v538 = vpack.c.bf16 %v522, %v522
    %v539 = vpack.c.bf16 %v523, %v523
    %v540 = vpack.c.bf16 %v524, %v524
    %v541 = vpack.c.bf16 %v525, %v525
    %v542 = vpack.c.bf16 %v526, %v526
    %v543 = vpack.c.bf16 %v527, %v527
    %v544 = vpack.c.bf16 %v528, %v528
    %v545 = vpack.c.bf16 %v529, %v529
    %v546 = vpack.c.bf16 %v530, %v530
    %v547 = vpack.c.bf16 %v531, %v531
    %v548 = vpack.c.bf16 %v532, %v532
    %565 = vrot.lane.b32.xlu0 %v533, 32
    %v566 = vpop.permute.xlu0 %565
    %567 = vrot.lane.b32.xlu0 %v534, 32
    %v568 = vpop.permute.xlu0 %567
    %569 = vrot.lane.b32.xlu0 %v535, 32
    %v570 = vpop.permute.xlu0 %569
    %571 = vrot.lane.b32.xlu0 %v536, 32
    %v572 = vpop.permute.xlu0 %571
    %573 = vrot.lane.b32.xlu0 %v537, 32
    %v574 = vpop.permute.xlu0 %573
    %575 = vrot.lane.b32.xlu0 %v538, 32
    %v576 = vpop.permute.xlu0 %575
    %577 = vrot.lane.b32.xlu0 %v539, 32
    %v578 = vpop.permute.xlu0 %577
    %579 = vrot.lane.b32.xlu0 %v540, 32
    %v580 = vpop.permute.xlu0 %579
    %581 = vrot.lane.b32.xlu0 %v541, 32
    %v582 = vpop.permute.xlu0 %581
    %583 = vrot.lane.b32.xlu0 %v542, 32
    %v584 = vpop.permute.xlu0 %583
    %585 = vrot.lane.b32.xlu0 %v543, 32
    %v586 = vpop.permute.xlu0 %585
    %587 = vrot.lane.b32.xlu0 %v544, 32
    %v588 = vpop.permute.xlu0 %587
    %589 = vrot.lane.b32.xlu0 %v545, 32
    %v590 = vpop.permute.xlu0 %589
    %591 = vrot.lane.b32.xlu0 %v546, 32
    %v592 = vpop.permute.xlu0 %591
    %593 = vrot.lane.b32.xlu0 %v547, 32
    %v594 = vpop.permute.xlu0 %593
    %595 = vrot.lane.b32.xlu0 %v548, 32
    %v596 = vpop.permute.xlu0 %595
    %vm613 = vcmask 322816
    %614 = vst.msk [vmem:[#allocation3] sm:$0xf] %vm613, %v566
    %615 = vst.msk [vmem:[#allocation3 + $0x4] sm:$0xf] %vm613, %v568
    %616 = vst.msk [vmem:[#allocation3 + $0x8] sm:$0xf] %vm613, %v570
    %617 = vst.msk [vmem:[#allocation3 + $0xc] sm:$0xf] %vm613, %v572
    %618 = vst.msk [vmem:[#allocation3 + $0x10] sm:$0xf] %vm613, %v574
    %619 = vst.msk [vmem:[#allocation3 + $0x14] sm:$0xf] %vm613, %v576
    %620 = vst.msk [vmem:[#allocation3 + $0x18] sm:$0xf] %vm613, %v578
    %621 = vst.msk [vmem:[#allocation3 + $0x1c] sm:$0xf] %vm613, %v580
    %622 = vst.msk [vmem:[#allocation3 + $0x20] sm:$0xf] %vm613, %v582
    %623 = vst.msk [vmem:[#allocation3 + $0x24] sm:$0xf] %vm613, %v584
    %624 = vst.msk [vmem:[#allocation3 + $0x28] sm:$0xf] %vm613, %v586
    %625 = vst.msk [vmem:[#allocation3 + $0x2c] sm:$0xf] %vm613, %v588
    %626 = vst.msk [vmem:[#allocation3 + $0x30] sm:$0xf] %vm613, %v590
    %627 = vst.msk [vmem:[#allocation3 + $0x34] sm:$0xf] %vm613, %v592
    %628 = vst.msk [vmem:[#allocation3 + $0x38] sm:$0xf] %vm613, %v594
    %629 = vst.msk [vmem:[#allocation3 + $0x3c] sm:$0xf] %vm613, %v596
    %v630 = vld [vmem:[%s112 + $0x2] sm:$0xff]
    %v631 = vld [vmem:[%s112 + $0x12] sm:$0xff]
    %v632 = vld [vmem:[%s112 + $0x22] sm:$0xff]
    %v633 = vld [vmem:[%s112 + $0x32] sm:$0xff]
    %v634 = vld [vmem:[%s112 + $0x42] sm:$0xff]
    %v635 = vld [vmem:[%s112 + $0x52] sm:$0xff]
    %v636 = vld [vmem:[%s112 + $0x62] sm:$0xff]
    %v637 = vld [vmem:[%s112 + $0x72] sm:$0xff]
    %v638 = vld [vmem:[%s112 + $0xa2] sm:$0xff]
    %v639 = vld [vmem:[%s112 + $0xb2] sm:$0xff]
    %v640 = vld [vmem:[%s112 + $0xc2] sm:$0xff]
    %v641 = vld [vmem:[%s112 + $0xd2] sm:$0xff]
    %v642 = vld [vmem:[%s112 + $0xe2] sm:$0xff]
    %v643 = vld [vmem:[%s112 + $0xf2] sm:$0xff]
    %v644 = vld [vmem:[%s112 + $0x102] sm:$0xff]
    %v645 = vld [vmem:[%s112 + $0x112] sm:$0xff]
    %v646 = vpack.c.bf16 %v630, %v630
    %v647 = vpack.c.bf16 %v631, %v631
    %v648 = vpack.c.bf16 %v632, %v632
    %v649 = vpack.c.bf16 %v633, %v633
    %v650 = vpack.c.bf16 %v634, %v634
    %v651 = vpack.c.bf16 %v635, %v635
    %v652 = vpack.c.bf16 %v636, %v636
    %v653 = vpack.c.bf16 %v637, %v637
    %v654 = vpack.c.bf16 %v638, %v638
    %v655 = vpack.c.bf16 %v639, %v639
    %v656 = vpack.c.bf16 %v640, %v640
    %v657 = vpack.c.bf16 %v641, %v641
    %v658 = vpack.c.bf16 %v642, %v642
    %v659 = vpack.c.bf16 %v643, %v643
    %v660 = vpack.c.bf16 %v644, %v644
    %v661 = vpack.c.bf16 %v645, %v645
    %678 = vrot.lane.b32.xlu0 %v646, 40
    %v679 = vpop.permute.xlu0 %678
    %680 = vrot.lane.b32.xlu0 %v647, 40
    %v681 = vpop.permute.xlu0 %680
    %682 = vrot.lane.b32.xlu0 %v648, 40
    %v683 = vpop.permute.xlu0 %682
    %684 = vrot.lane.b32.xlu0 %v649, 40
    %v685 = vpop.permute.xlu0 %684
    %686 = vrot.lane.b32.xlu0 %v650, 40
    %v687 = vpop.permute.xlu0 %686
    %688 = vrot.lane.b32.xlu0 %v651, 40
    %v689 = vpop.permute.xlu0 %688
    %690 = vrot.lane.b32.xlu0 %v652, 40
    %v691 = vpop.permute.xlu0 %690
    %692 = vrot.lane.b32.xlu0 %v653, 40
    %v693 = vpop.permute.xlu0 %692
    %694 = vrot.lane.b32.xlu0 %v654, 40
    %v695 = vpop.permute.xlu0 %694
    %696 = vrot.lane.b32.xlu0 %v655, 40
    %v697 = vpop.permute.xlu0 %696
    %698 = vrot.lane.b32.xlu0 %v656, 40
    %v699 = vpop.permute.xlu0 %698
    %700 = vrot.lane.b32.xlu0 %v657, 40
    %v701 = vpop.permute.xlu0 %700
    %702 = vrot.lane.b32.xlu0 %v658, 40
    %v703 = vpop.permute.xlu0 %702
    %704 = vrot.lane.b32.xlu0 %v659, 40
    %v705 = vpop.permute.xlu0 %704
    %706 = vrot.lane.b32.xlu0 %v660, 40
    %v707 = vpop.permute.xlu0 %706
    %708 = vrot.lane.b32.xlu0 %v661, 40
    %v709 = vpop.permute.xlu0 %708
    %vm726 = vcmask 388416
    %727 = vst.msk [vmem:[#allocation3] sm:$0xf] %vm726, %v679
    %728 = vst.msk [vmem:[#allocation3 + $0x4] sm:$0xf] %vm726, %v681
    %729 = vst.msk [vmem:[#allocation3 + $0x8] sm:$0xf] %vm726, %v683
    %730 = vst.msk [vmem:[#allocation3 + $0xc] sm:$0xf] %vm726, %v685
    %731 = vst.msk [vmem:[#allocation3 + $0x10] sm:$0xf] %vm726, %v687
    %732 = vst.msk [vmem:[#allocation3 + $0x14] sm:$0xf] %vm726, %v689
    %733 = vst.msk [vmem:[#allocation3 + $0x18] sm:$0xf] %vm726, %v691
    %734 = vst.msk [vmem:[#allocation3 + $0x1c] sm:$0xf] %vm726, %v693
    %735 = vst.msk [vmem:[#allocation3 + $0x20] sm:$0xf] %vm726, %v695
    %736 = vst.msk [vmem:[#allocation3 + $0x24] sm:$0xf] %vm726, %v697
    %737 = vst.msk [vmem:[#allocation3 + $0x28] sm:$0xf] %vm726, %v699
    %738 = vst.msk [vmem:[#allocation3 + $0x2c] sm:$0xf] %vm726, %v701
    %739 = vst.msk [vmem:[#allocation3 + $0x30] sm:$0xf] %vm726, %v703
    %740 = vst.msk [vmem:[#allocation3 + $0x34] sm:$0xf] %vm726, %v705
    %741 = vst.msk [vmem:[#allocation3 + $0x38] sm:$0xf] %vm726, %v707
    %742 = vst.msk [vmem:[#allocation3 + $0x3c] sm:$0xf] %vm726, %v709
    %s743 = scalar_lea.vmem [#allocation2], 32
    %v744 = vld [vmem:[%s743] sm:$0xff]
    %v745 = vld [vmem:[%s743 + $0x10] sm:$0xff]
    %v746 = vld [vmem:[%s743 + $0x20] sm:$0xff]
    %v747 = vld [vmem:[%s743 + $0x30] sm:$0xff]
    %v748 = vld [vmem:[%s743 + $0x40] sm:$0xff]
    %v749 = vld [vmem:[%s743 + $0x50] sm:$0xff]
    %v750 = vld [vmem:[%s743 + $0x60] sm:$0xff]
    %v751 = vld [vmem:[%s743 + $0x70] sm:$0xff]
    %v752 = vld [vmem:[%s743 + $0xa0] sm:$0xff]
    %v753 = vld [vmem:[%s743 + $0xb0] sm:$0xff]
    %v754 = vld [vmem:[%s743 + $0xc0] sm:$0xff]
    %v755 = vld [vmem:[%s743 + $0xd0] sm:$0xff]
    %v756 = vld [vmem:[%s743 + $0xe0] sm:$0xff]
    %v757 = vld [vmem:[%s743 + $0xf0] sm:$0xff]
    %v758 = vld [vmem:[%s743 + $0x100] sm:$0xff]
    %v759 = vld [vmem:[%s743 + $0x110] sm:$0xff]
    %v760 = vpack.c.bf16 %v744, %v744
    %v761 = vpack.c.bf16 %v745, %v745
    %v762 = vpack.c.bf16 %v746, %v746
    %v763 = vpack.c.bf16 %v747, %v747
    %v764 = vpack.c.bf16 %v748, %v748
    %v765 = vpack.c.bf16 %v749, %v749
    %v766 = vpack.c.bf16 %v750, %v750
    %v767 = vpack.c.bf16 %v751, %v751
    %v768 = vpack.c.bf16 %v752, %v752
    %v769 = vpack.c.bf16 %v753, %v753
    %v770 = vpack.c.bf16 %v754, %v754
    %v771 = vpack.c.bf16 %v755, %v755
    %v772 = vpack.c.bf16 %v756, %v756
    %v773 = vpack.c.bf16 %v757, %v757
    %v774 = vpack.c.bf16 %v758, %v758
    %v775 = vpack.c.bf16 %v759, %v759
    %792 = vrot.lane.b32.xlu0 %v760, 48
    %v793 = vpop.permute.xlu0 %792
    %794 = vrot.lane.b32.xlu0 %v761, 48
    %v795 = vpop.permute.xlu0 %794
    %796 = vrot.lane.b32.xlu0 %v762, 48
    %v797 = vpop.permute.xlu0 %796
    %798 = vrot.lane.b32.xlu0 %v763, 48
    %v799 = vpop.permute.xlu0 %798
    %800 = vrot.lane.b32.xlu0 %v764, 48
    %v801 = vpop.permute.xlu0 %800
    %802 = vrot.lane.b32.xlu0 %v765, 48
    %v803 = vpop.permute.xlu0 %802
    %804 = vrot.lane.b32.xlu0 %v766, 48
    %v805 = vpop.permute.xlu0 %804
    %806 = vrot.lane.b32.xlu0 %v767, 48
    %v807 = vpop.permute.xlu0 %806
    %808 = vrot.lane.b32.xlu0 %v768, 48
    %v809 = vpop.permute.xlu0 %808
    %810 = vrot.lane.b32.xlu0 %v769, 48
    %v811 = vpop.permute.xlu0 %810
    %812 = vrot.lane.b32.xlu0 %v770, 48
    %v813 = vpop.permute.xlu0 %812
    %814 = vrot.lane.b32.xlu0 %v771, 48
    %v815 = vpop.permute.xlu0 %814
    %816 = vrot.lane.b32.xlu0 %v772, 48
    %v817 = vpop.permute.xlu0 %816
    %818 = vrot.lane.b32.xlu0 %v773, 48
    %v819 = vpop.permute.xlu0 %818
    %820 = vrot.lane.b32.xlu0 %v774, 48
    %v821 = vpop.permute.xlu0 %820
    %822 = vrot.lane.b32.xlu0 %v775, 48
    %v823 = vpop.permute.xlu0 %822
    %vm840 = vcmask 454016
    %841 = vst.msk [vmem:[#allocation3] sm:$0xf] %vm840, %v793
    %842 = vst.msk [vmem:[#allocation3 + $0x4] sm:$0xf] %vm840, %v795
    %843 = vst.msk [vmem:[#allocation3 + $0x8] sm:$0xf] %vm840, %v797
    %844 = vst.msk [vmem:[#allocation3 + $0xc] sm:$0xf] %vm840, %v799
    %845 = vst.msk [vmem:[#allocation3 + $0x10] sm:$0xf] %vm840, %v801
    %846 = vst.msk [vmem:[#allocation3 + $0x14] sm:$0xf] %vm840, %v803
    %847 = vst.msk [vmem:[#allocation3 + $0x18] sm:$0xf] %vm840, %v805
    %848 = vst.msk [vmem:[#allocation3 + $0x1c] sm:$0xf] %vm840, %v807
    %849 = vst.msk [vmem:[#allocation3 + $0x20] sm:$0xf] %vm840, %v809
    %850 = vst.msk [vmem:[#allocation3 + $0x24] sm:$0xf] %vm840, %v811
    %851 = vst.msk [vmem:[#allocation3 + $0x28] sm:$0xf] %vm840, %v813
    %852 = vst.msk [vmem:[#allocation3 + $0x2c] sm:$0xf] %vm840, %v815
    %853 = vst.msk [vmem:[#allocation3 + $0x30] sm:$0xf] %vm840, %v817
    %854 = vst.msk [vmem:[#allocation3 + $0x34] sm:$0xf] %vm840, %v819
    %855 = vst.msk [vmem:[#allocation3 + $0x38] sm:$0xf] %vm840, %v821
    %856 = vst.msk [vmem:[#allocation3 + $0x3c] sm:$0xf] %vm840, %v823
    %v857 = vld [vmem:[%s743 + $0x1] sm:$0xff]
    %v858 = vld [vmem:[%s743 + $0x11] sm:$0xff]
    %v859 = vld [vmem:[%s743 + $0x21] sm:$0xff]
    %v860 = vld [vmem:[%s743 + $0x31] sm:$0xff]
    %v861 = vld [vmem:[%s743 + $0x41] sm:$0xff]
    %v862 = vld [vmem:[%s743 + $0x51] sm:$0xff]
    %v863 = vld [vmem:[%s743 + $0x61] sm:$0xff]
    %v864 = vld [vmem:[%s743 + $0x71] sm:$0xff]
    %v865 = vld [vmem:[%s743 + $0xa1] sm:$0xff]
    %v866 = vld [vmem:[%s743 + $0xb1] sm:$0xff]
    %v867 = vld [vmem:[%s743 + $0xc1] sm:$0xff]
    %v868 = vld [vmem:[%s743 + $0xd1] sm:$0xff]
    %v869 = vld [vmem:[%s743 + $0xe1] sm:$0xff]
    %v870 = vld [vmem:[%s743 + $0xf1] sm:$0xff]
    %v871 = vld [vmem:[%s743 + $0x101] sm:$0xff]
    %v872 = vld [vmem:[%s743 + $0x111] sm:$0xff]
    %v873 = vpack.c.bf16 %v857, %v857
    %v874 = vpack.c.bf16 %v858, %v858
    %v875 = vpack.c.bf16 %v859, %v859
    %v876 = vpack.c.bf16 %v860, %v860
    %v877 = vpack.c.bf16 %v861, %v861
    %v878 = vpack.c.bf16 %v862, %v862
    %v879 = vpack.c.bf16 %v863, %v863
    %v880 = vpack.c.bf16 %v864, %v864
    %v881 = vpack.c.bf16 %v865, %v865
    %v882 = vpack.c.bf16 %v866, %v866
    %v883 = vpack.c.bf16 %v867, %v867
    %v884 = vpack.c.bf16 %v868, %v868
    %v885 = vpack.c.bf16 %v869, %v869
    %v886 = vpack.c.bf16 %v870, %v870
    %v887 = vpack.c.bf16 %v871, %v871
    %v888 = vpack.c.bf16 %v872, %v872
    %905 = vrot.lane.b32.xlu0 %v873, 56
    %v906 = vpop.permute.xlu0 %905
    %907 = vrot.lane.b32.xlu0 %v874, 56
    %v908 = vpop.permute.xlu0 %907
    %909 = vrot.lane.b32.xlu0 %v875, 56
    %v910 = vpop.permute.xlu0 %909
    %911 = vrot.lane.b32.xlu0 %v876, 56
    %v912 = vpop.permute.xlu0 %911
    %913 = vrot.lane.b32.xlu0 %v877, 56
    %v914 = vpop.permute.xlu0 %913
    %915 = vrot.lane.b32.xlu0 %v878, 56
    %v916 = vpop.permute.xlu0 %915
    %917 = vrot.lane.b32.xlu0 %v879, 56
    %v918 = vpop.permute.xlu0 %917
    %919 = vrot.lane.b32.xlu0 %v880, 56
    %v920 = vpop.permute.xlu0 %919
    %921 = vrot.lane.b32.xlu0 %v881, 56
    %v922 = vpop.permute.xlu0 %921
    %923 = vrot.lane.b32.xlu0 %v882, 56
    %v924 = vpop.permute.xlu0 %923
    %925 = vrot.lane.b32.xlu0 %v883, 56
    %v926 = vpop.permute.xlu0 %925
    %927 = vrot.lane.b32.xlu0 %v884, 56
    %v928 = vpop.permute.xlu0 %927
    %929 = vrot.lane.b32.xlu0 %v885, 56
    %v930 = vpop.permute.xlu0 %929
    %931 = vrot.lane.b32.xlu0 %v886, 56
    %v932 = vpop.permute.xlu0 %931
    %933 = vrot.lane.b32.xlu0 %v887, 56
    %v934 = vpop.permute.xlu0 %933
    %935 = vrot.lane.b32.xlu0 %v888, 56
    %v936 = vpop.permute.xlu0 %935
    %vm953 = vcmask 519616
    %954 = vst.msk [vmem:[#allocation3] sm:$0xf] %vm953, %v906
    %955 = vst.msk [vmem:[#allocation3 + $0x4] sm:$0xf] %vm953, %v908
    %956 = vst.msk [vmem:[#allocation3 + $0x8] sm:$0xf] %vm953, %v910
    %957 = vst.msk [vmem:[#allocation3 + $0xc] sm:$0xf] %vm953, %v912
    %958 = vst.msk [vmem:[#allocation3 + $0x10] sm:$0xf] %vm953, %v914
    %959 = vst.msk [vmem:[#allocation3 + $0x14] sm:$0xf] %vm953, %v916
    %960 = vst.msk [vmem:[#allocation3 + $0x18] sm:$0xf] %vm953, %v918
    %961 = vst.msk [vmem:[#allocation3 + $0x1c] sm:$0xf] %vm953, %v920
    %962 = vst.msk [vmem:[#allocation3 + $0x20] sm:$0xf] %vm953, %v922
    %963 = vst.msk [vmem:[#allocation3 + $0x24] sm:$0xf] %vm953, %v924
    %964 = vst.msk [vmem:[#allocation3 + $0x28] sm:$0xf] %vm953, %v926
    %965 = vst.msk [vmem:[#allocation3 + $0x2c] sm:$0xf] %vm953, %v928
    %966 = vst.msk [vmem:[#allocation3 + $0x30] sm:$0xf] %vm953, %v930
    %967 = vst.msk [vmem:[#allocation3 + $0x34] sm:$0xf] %vm953, %v932
    %968 = vst.msk [vmem:[#allocation3 + $0x38] sm:$0xf] %vm953, %v934
    %969 = vst.msk [vmem:[#allocation3 + $0x3c] sm:$0xf] %vm953, %v936
    %v970 = vld [vmem:[%s743 + $0x2] sm:$0xff]
    %v971 = vld [vmem:[%s743 + $0x12] sm:$0xff]
    %v972 = vld [vmem:[%s743 + $0x22] sm:$0xff]
    %v973 = vld [vmem:[%s743 + $0x32] sm:$0xff]
    %v974 = vld [vmem:[%s743 + $0x42] sm:$0xff]
    %v975 = vld [vmem:[%s743 + $0x52] sm:$0xff]
    %v976 = vld [vmem:[%s743 + $0x62] sm:$0xff]
    %v977 = vld [vmem:[%s743 + $0x72] sm:$0xff]
    %v978 = vld [vmem:[%s743 + $0xa2] sm:$0xff]
    %v979 = vld [vmem:[%s743 + $0xb2] sm:$0xff]
    %v980 = vld [vmem:[%s743 + $0xc2] sm:$0xff]
    %v981 = vld [vmem:[%s743 + $0xd2] sm:$0xff]
    %v982 = vld [vmem:[%s743 + $0xe2] sm:$0xff]
    %v983 = vld [vmem:[%s743 + $0xf2] sm:$0xff]
    %v984 = vld [vmem:[%s743 + $0x102] sm:$0xff]
    %v985 = vld [vmem:[%s743 + $0x112] sm:$0xff]
    %v986 = vpack.c.bf16 %v970, %v970
    %v987 = vpack.c.bf16 %v971, %v971
    %v988 = vpack.c.bf16 %v972, %v972
    %v989 = vpack.c.bf16 %v973, %v973
    %v990 = vpack.c.bf16 %v974, %v974
    %v991 = vpack.c.bf16 %v975, %v975
    %v992 = vpack.c.bf16 %v976, %v976
    %v993 = vpack.c.bf16 %v977, %v977
    %v994 = vpack.c.bf16 %v978, %v978
    %v995 = vpack.c.bf16 %v979, %v979
    %v996 = vpack.c.bf16 %v980, %v980
    %v997 = vpack.c.bf16 %v981, %v981
    %v998 = vpack.c.bf16 %v982, %v982
    %v999 = vpack.c.bf16 %v983, %v983
    %v1000 = vpack.c.bf16 %v984, %v984
    %v1001 = vpack.c.bf16 %v985, %v985
    %1018 = vrot.lane.b32.xlu0 %v986, 64
    %v1019 = vpop.permute.xlu0 %1018
    %1020 = vrot.lane.b32.xlu0 %v987, 64
    %v1021 = vpop.permute.xlu0 %1020
    %1022 = vrot.lane.b32.xlu0 %v988, 64
    %v1023 = vpop.permute.xlu0 %1022
    %1024 = vrot.lane.b32.xlu0 %v989, 64
    %v1025 = vpop.permute.xlu0 %1024
    %1026 = vrot.lane.b32.xlu0 %v990, 64
    %v1027 = vpop.permute.xlu0 %1026
    %1028 = vrot.lane.b32.xlu0 %v991, 64
    %v1029 = vpop.permute.xlu0 %1028
    %1030 = vrot.lane.b32.xlu0 %v992, 64
    %v1031 = vpop.permute.xlu0 %1030
    %1032 = vrot.lane.b32.xlu0 %v993, 64
    %v1033 = vpop.permute.xlu0 %1032
    %1034 = vrot.lane.b32.xlu0 %v994, 64
    %v1035 = vpop.permute.xlu0 %1034
    %1036 = vrot.lane.b32.xlu0 %v995, 64
    %v1037 = vpop.permute.xlu0 %1036
    %1038 = vrot.lane.b32.xlu0 %v996, 64
    %v1039 = vpop.permute.xlu0 %1038
    %1040 = vrot.lane.b32.xlu0 %v997, 64
    %v1041 = vpop.permute.xlu0 %1040
    %1042 = vrot.lane.b32.xlu0 %v998, 64
    %v1043 = vpop.permute.xlu0 %1042
    %1044 = vrot.lane.b32.xlu0 %v999, 64
    %v1045 = vpop.permute.xlu0 %1044
    %1046 = vrot.lane.b32.xlu0 %v1000, 64
    %v1047 = vpop.permute.xlu0 %1046
    %1048 = vrot.lane.b32.xlu0 %v1001, 64
    %v1049 = vpop.permute.xlu0 %1048
    %vm1066 = vcmask 585216
    %1067 = vst.msk [vmem:[#allocation3] sm:$0xf] %vm1066, %v1019
    %1068 = vst.msk [vmem:[#allocation3 + $0x4] sm:$0xf] %vm1066, %v1021
    %1069 = vst.msk [vmem:[#allocation3 + $0x8] sm:$0xf] %vm1066, %v1023
    %1070 = vst.msk [vmem:[#allocation3 + $0xc] sm:$0xf] %vm1066, %v1025
    %1071 = vst.msk [vmem:[#allocation3 + $0x10] sm:$0xf] %vm1066, %v1027
    %1072 = vst.msk [vmem:[#allocation3 + $0x14] sm:$0xf] %vm1066, %v1029
    %1073 = vst.msk [vmem:[#allocation3 + $0x18] sm:$0xf] %vm1066, %v1031
    %1074 = vst.msk [vmem:[#allocation3 + $0x1c] sm:$0xf] %vm1066, %v1033
    %1075 = vst.msk [vmem:[#allocation3 + $0x20] sm:$0xf] %vm1066, %v1035
    %1076 = vst.msk [vmem:[#allocation3 + $0x24] sm:$0xf] %vm1066, %v1037
    %1077 = vst.msk [vmem:[#allocation3 + $0x28] sm:$0xf] %vm1066, %v1039
    %1078 = vst.msk [vmem:[#allocation3 + $0x2c] sm:$0xf] %vm1066, %v1041
    %1079 = vst.msk [vmem:[#allocation3 + $0x30] sm:$0xf] %vm1066, %v1043
    %1080 = vst.msk [vmem:[#allocation3 + $0x34] sm:$0xf] %vm1066, %v1045
    %1081 = vst.msk [vmem:[#allocation3 + $0x38] sm:$0xf] %vm1066, %v1047
    %1082 = vst.msk [vmem:[#allocation3 + $0x3c] sm:$0xf] %vm1066, %v1049
    %v1083 = vld [vmem:[#allocation3] sm:$0xf]
    %v1084 = vld [vmem:[#allocation3 + $0x4] sm:$0xf]
    %v1085 = vld [vmem:[#allocation3 + $0x8] sm:$0xf]
    %v1086 = vld [vmem:[#allocation3 + $0xc] sm:$0xf]
    %v1087 = vld [vmem:[#allocation3 + $0x10] sm:$0xf]
    %v1088 = vld [vmem:[#allocation3 + $0x14] sm:$0xf]
    %v1089 = vld [vmem:[#allocation3 + $0x18] sm:$0xf]
    %v1090 = vld [vmem:[#allocation3 + $0x1c] sm:$0xf]
    %v1091 = vld [vmem:[#allocation3 + $0x20] sm:$0xf]
    %v1092 = vld [vmem:[#allocation3 + $0x24] sm:$0xf]
    %v1093 = vld [vmem:[#allocation3 + $0x28] sm:$0xf]
    %v1094 = vld [vmem:[#allocation3 + $0x2c] sm:$0xf]
    %v1095 = vld [vmem:[#allocation3 + $0x30] sm:$0xf]
    %v1096 = vld [vmem:[#allocation3 + $0x34] sm:$0xf]
    %v1097 = vld [vmem:[#allocation3 + $0x38] sm:$0xf]
    %v1098 = vld [vmem:[#allocation3 + $0x3c] sm:$0xf]
    %v1099 = vld [vmem:[%s1] sm:$0xf]
    %v1100 = vld [vmem:[%s1 + $0x4] sm:$0xf]
    %v1101 = vld [vmem:[%s1 + $0x8] sm:$0xf]
    %v1102 = vld [vmem:[%s1 + $0xc] sm:$0xf]
    %v1103 = vld [vmem:[%s1 + $0x10] sm:$0xf]
    %v1104 = vld [vmem:[%s1 + $0x14] sm:$0xf]
    %v1105 = vld [vmem:[%s1 + $0x18] sm:$0xf]
    %v1106 = vld [vmem:[%s1 + $0x1c] sm:$0xf]
    %v1107 = vld [vmem:[%s1 + $0x20] sm:$0xf]
    %v1124 = vunpack.c.l.b16 %v1083
    %v1125 = vunpack.c.l.b16 %v1084
    %v1126 = vunpack.c.l.b16 %v1085
    %v1127 = vunpack.c.l.b16 %v1086
    %v1128 = vunpack.c.l.b16 %v1087
    %v1129 = vunpack.c.l.b16 %v1088
    %v1130 = vunpack.c.l.b16 %v1089
    %v1131 = vunpack.c.l.b16 %v1090
    %v1132 = vunpack.c.l.b16 %v1091
    %v1133 = vunpack.c.l.b16 %v1092
    %v1134 = vunpack.c.l.b16 %v1093
    %v1135 = vunpack.c.l.b16 %v1094
    %v1136 = vunpack.c.l.b16 %v1095
    %v1137 = vunpack.c.l.b16 %v1096
    %v1138 = vunpack.c.l.b16 %v1097
    %v1139 = vunpack.c.l.b16 %v1098
    %v1140 = vpack.c.b16 %v1125, %v1124
    %v1141 = vpack.c.b16 %v1127, %v1126
    %v1142 = vpack.c.b16 %v1129, %v1128
    %v1143 = vpack.c.b16 %v1131, %v1130
    %v1144 = vpack.c.b16 %v1133, %v1132
    %v1145 = vpack.c.b16 %v1135, %v1134
    %v1146 = vpack.c.b16 %v1137, %v1136
    %v1147 = vpack.c.b16 %v1139, %v1138
    %v1157 = vunpack.c.l.b16 %v1099
    %v1158 = vunpack.c.l.b16 %v1100
    %v1159 = vunpack.c.l.b16 %v1101
    %v1160 = vunpack.c.l.b16 %v1102
    %v1161 = vunpack.c.l.b16 %v1103
    %v1162 = vunpack.c.l.b16 %v1104
    %v1163 = vunpack.c.l.b16 %v1105
    %v1164 = vunpack.c.l.b16 %v1106
    %v1165 = vunpack.c.l.b16 %v1107
    %v1166 = vpack.c.b16 %v1158, %v1157
    %v1167 = vpack.c.b16 %v1160, %v1159
    %v1168 = vpack.c.b16 %v1162, %v1161
    %v1169 = vpack.c.b16 %v1164, %v1163
    %v1170 = vpack.c.b16 %v1165, %v1165
    %vm1175 = vcmask 588800
    %v1177 = vsel %vm1175, %v1140, 0
    %v1180 = vsel %vm1175, %v1141, 0
    %v1183 = vsel %vm1175, %v1142, 0
    %v1186 = vsel %vm1175, %v1143, 0
    %v1189 = vsel %vm1175, %v1144, 0
    %v1192 = vsel %vm1175, %v1145, 0
    %v1195 = vsel %vm1175, %v1146, 0
    %v1198 = vsel %vm1175, %v1147, 0
    %vm1200 = vcmask 1043456
    %v1202 = vsel %vm1200, %v1170, 0
    %1204 = vmatpush.bf16.msra.mxu0 0
    %1205 = vmatpush.bf16.msra.mxu0 0
    %1206 = vmatpush.bf16.msra.mxu0 0
    %1207 = vmatpush.bf16.msra.mxu0 %v1202
    %1208 = vmatpush.bf16.msra.mxu0 %v1169
    %1209 = vmatpush.bf16.msra.mxu0 %v1168
    %1210 = vmatpush.bf16.msra.mxu0 %v1167
    %1211 = vmatpush.bf16.msra.mxu0 %v1166
    %1212 = vmatmul.bf16.gmra.mxu0 %v1177
    %v1213 = vpop.f32.mrf.mxu0
    %v1214 = vadd.f32 0.0, %v1213
    %v1215 = vpop.f32.mrf.mxu0
    %v1216 = vadd.f32 0.0, %v1215
    %1217 = vmatmul.bf16.gmra.mxu0 %v1180
    %v1218 = vpop.f32.mrf.mxu0
    %v1219 = vadd.f32 0.0, %v1218
    %v1220 = vpop.f32.mrf.mxu0
    %v1221 = vadd.f32 0.0, %v1220
    %1222 = vmatmul.bf16.gmra.mxu0 %v1183
    %v1223 = vpop.f32.mrf.mxu0
    %v1224 = vadd.f32 0.0, %v1223
    %v1225 = vpop.f32.mrf.mxu0
    %v1226 = vadd.f32 0.0, %v1225
    %1227 = vmatmul.bf16.gmra.mxu0 %v1186
    %v1228 = vpop.f32.mrf.mxu0
    %v1229 = vadd.f32 0.0, %v1228
    %v1230 = vpop.f32.mrf.mxu0
    %v1231 = vadd.f32 0.0, %v1230
    %1232 = vmatmul.bf16.gmra.mxu0 %v1189
    %v1233 = vpop.f32.mrf.mxu0
    %v1234 = vadd.f32 0.0, %v1233
    %v1235 = vpop.f32.mrf.mxu0
    %v1236 = vadd.f32 0.0, %v1235
    %1237 = vmatmul.bf16.gmra.mxu0 %v1192
    %v1238 = vpop.f32.mrf.mxu0
    %v1239 = vadd.f32 0.0, %v1238
    %v1240 = vpop.f32.mrf.mxu0
    %v1241 = vadd.f32 0.0, %v1240
    %1242 = vmatmul.bf16.gmra.mxu0 %v1195
    %v1243 = vpop.f32.mrf.mxu0
    %v1244 = vadd.f32 0.0, %v1243
    %v1245 = vpop.f32.mrf.mxu0
    %v1246 = vadd.f32 0.0, %v1245
    %1247 = vmatmul.bf16.gmra.mxu0 %v1198
    %v1248 = vpop.f32.mrf.mxu0
    %v1249 = vadd.f32 0.0, %v1248
    %v1250 = vpop.f32.mrf.mxu0
    %v1251 = vadd.f32 0.0, %v1250
    %1252 = vdwg.mxu0
    %v1253 = vld [vmem:[%s2] sm:$0x1]
    %v1254 = vld [vmem:[%s3] sm:$0x1]
    %v1255 = vsel %vm44, %v1214, 0.0
    %v1256 = vsel %vm44, %v1216, 0.0
    %v1257 = vadd.f32 %v1255, %v1256
    %v1258 = vsel %vm44, %v1219, 0.0
    %v1259 = vadd.f32 %v1257, %v1258
    %v1260 = vsel %vm44, %v1221, 0.0
    %v1261 = vadd.f32 %v1259, %v1260
    %v1262 = vsel %vm44, %v1224, 0.0
    %v1263 = vadd.f32 %v1261, %v1262
    %v1264 = vsel %vm44, %v1226, 0.0
    %v1265 = vadd.f32 %v1263, %v1264
    %v1266 = vsel %vm44, %v1229, 0.0
    %v1267 = vadd.f32 %v1265, %v1266
    %v1268 = vsel %vm44, %v1231, 0.0
    %v1269 = vadd.f32 %v1267, %v1268
    %v1270 = vsel %vm44, %v1234, 0.0
    %v1271 = vadd.f32 %v1269, %v1270
    %v1272 = vsel %vm44, %v1236, 0.0
    %v1273 = vadd.f32 %v1271, %v1272
    %v1274 = vsel %vm44, %v1239, 0.0
    %v1275 = vadd.f32 %v1273, %v1274
    %v1276 = vsel %vm44, %v1241, 0.0
    %v1277 = vadd.f32 %v1275, %v1276
    %v1278 = vsel %vm44, %v1244, 0.0
    %v1279 = vadd.f32 %v1277, %v1278
    %v1280 = vsel %vm44, %v1246, 0.0
    %v1281 = vadd.f32 %v1279, %v1280
    %v1282 = vsel %vm44, %v1249, 0.0
    %v1283 = vadd.f32 %v1281, %v1282
    %v1284 = vsel %vm44, %v1251, 0.0
    %v1285 = vadd.f32 %v1283, %v1284
    %v1286 = vrot.slane %v1285, 4
    %v1287 = vadd.f32 %v1285, %v1286
    %v1288 = vrot.slane %v1287, 2
    %v1289 = vadd.f32 %v1287, %v1288
    %v1290 = vrot.slane %v1289, 1
    %v1291 = vadd.f32 %v1289, %v1290
    %v1292 = vrcp.pop 128.0
    %v1293 = vmul.f32 128.0, %v1292
    %v1294 = vsub.f32 1.0, %v1293
    %v1295 = vmul.f32 %v1292, %v1294
    %v1296 = vadd.f32 %v1292, %v1295
    %vm1297 = vweird.f32 %v1292
    %v1298 = vsel %vm1297, %v1292, %v1296
    %v1299 = vmul.f32 %v1291, %v1298
    %v1300 = vmul.f32 %v1214, %v1214
    %v1301 = vmul.f32 %v1216, %v1216
    %v1302 = vmul.f32 %v1219, %v1219
    %v1303 = vmul.f32 %v1221, %v1221
    %v1304 = vmul.f32 %v1224, %v1224
    %v1305 = vmul.f32 %v1226, %v1226
    %v1306 = vmul.f32 %v1229, %v1229
    %v1307 = vmul.f32 %v1231, %v1231
    %v1308 = vmul.f32 %v1234, %v1234
    %v1309 = vmul.f32 %v1236, %v1236
    %v1310 = vmul.f32 %v1239, %v1239
    %v1311 = vmul.f32 %v1241, %v1241
    %v1312 = vmul.f32 %v1244, %v1244
    %v1313 = vmul.f32 %v1246, %v1246
    %v1314 = vmul.f32 %v1249, %v1249
    %v1315 = vmul.f32 %v1251, %v1251
    %v1316 = vsel %vm44, %v1300, 0.0
    %v1317 = vsel %vm44, %v1301, 0.0
    %v1318 = vadd.f32 %v1316, %v1317
    %v1319 = vsel %vm44, %v1302, 0.0
    %v1320 = vadd.f32 %v1318, %v1319
    %v1321 = vsel %vm44, %v1303, 0.0
    %v1322 = vadd.f32 %v1320, %v1321
    %v1323 = vsel %vm44, %v1304, 0.0
    %v1324 = vadd.f32 %v1322, %v1323
    %v1325 = vsel %vm44, %v1305, 0.0
    %v1326 = vadd.f32 %v1324, %v1325
    %v1327 = vsel %vm44, %v1306, 0.0
    %v1328 = vadd.f32 %v1326, %v1327
    %v1329 = vsel %vm44, %v1307, 0.0
    %v1330 = vadd.f32 %v1328, %v1329
    %v1331 = vsel %vm44, %v1308, 0.0
    %v1332 = vadd.f32 %v1330, %v1331
    %v1333 = vsel %vm44, %v1309, 0.0
    %v1334 = vadd.f32 %v1332, %v1333
    %v1335 = vsel %vm44, %v1310, 0.0
    %v1336 = vadd.f32 %v1334, %v1335
    %v1337 = vsel %vm44, %v1311, 0.0
    %v1338 = vadd.f32 %v1336, %v1337
    %v1339 = vsel %vm44, %v1312, 0.0
    %v1340 = vadd.f32 %v1338, %v1339
    %v1341 = vsel %vm44, %v1313, 0.0
    %v1342 = vadd.f32 %v1340, %v1341
    %v1343 = vsel %vm44, %v1314, 0.0
    %v1344 = vadd.f32 %v1342, %v1343
    %v1345 = vsel %vm44, %v1315, 0.0
    %v1346 = vadd.f32 %v1344, %v1345
    %v1347 = vrot.slane %v1346, 4
    %v1348 = vadd.f32 %v1346, %v1347
    %v1349 = vrot.slane %v1348, 2
    %v1350 = vadd.f32 %v1348, %v1349
    %v1351 = vrot.slane %v1350, 1
    %v1352 = vadd.f32 %v1350, %v1351
    %v1353 = vmul.f32 %v1352, %v1298
    %v1354 = vmul.f32 %v1299, %v1299
    %v1355 = vsub.f32 %v1353, %v1354
    %v1356 = vadd.f32 %v1355, 1e-05
    %v1357 = vrsqrt.pop %v1356
    %v1358 = vmul.f32 %v1357, %v1356
    %v1359 = vmul.f32 %v1358, %v1357
    %v1360 = vmul.f32 0.5, %v1359
    %v1361 = vsub.f32 1.5, %v1360
    %v1362 = vmul.f32 %v1357, %v1361
    %vm1363 = vweird.f32 %v1356
    %vm1364 = vweird.f32 %v1357
    %vm1365 = vmor %vm1363, %vm1364
    %v1366 = vsel %vm1365, %v1357, %v1362
    %v1367 = vmul.f32 %v1253, %v1366
    %v1368 = vmul.f32 %v1299, %v1367
    %v1369 = vsub.f32 %v1254, %v1368
    %v1371 = vperm.slane %v1367, 0
    %v1373 = vmul.f32 %v1214, %v1371
    %v1374 = vmul.f32 %v1216, %v1371
    %v1375 = vmul.f32 %v1219, %v1371
    %v1376 = vmul.f32 %v1221, %v1371
    %v1377 = vmul.f32 %v1224, %v1371
    %v1378 = vmul.f32 %v1226, %v1371
    %v1379 = vmul.f32 %v1229, %v1371
    %v1380 = vmul.f32 %v1231, %v1371
    %v1381 = vmul.f32 %v1234, %v1371
    %v1382 = vmul.f32 %v1236, %v1371
    %v1383 = vmul.f32 %v1239, %v1371
    %v1384 = vmul.f32 %v1241, %v1371
    %v1385 = vmul.f32 %v1244, %v1371
    %v1386 = vmul.f32 %v1246, %v1371
    %v1387 = vmul.f32 %v1249, %v1371
    %v1388 = vmul.f32 %v1251, %v1371
    %v1390 = vperm.slane %v1369, 0
    %v1392 = vadd.f32 %v1373, %v1390
    %v1393 = vadd.f32 %v1374, %v1390
    %v1394 = vadd.f32 %v1375, %v1390
    %v1395 = vadd.f32 %v1376, %v1390
    %v1396 = vadd.f32 %v1377, %v1390
    %v1397 = vadd.f32 %v1378, %v1390
    %v1398 = vadd.f32 %v1379, %v1390
    %v1399 = vadd.f32 %v1380, %v1390
    %v1400 = vadd.f32 %v1381, %v1390
    %v1401 = vadd.f32 %v1382, %v1390
    %v1402 = vadd.f32 %v1383, %v1390
    %v1403 = vadd.f32 %v1384, %v1390
    %v1404 = vadd.f32 %v1385, %v1390
    %v1405 = vadd.f32 %v1386, %v1390
    %v1406 = vadd.f32 %v1387, %v1390
    %v1407 = vadd.f32 %v1388, %v1390
    %v1408 = vmax.f32 %v1392, 0.0
    %v1409 = vmax.f32 %v1393, 0.0
    %v1410 = vmax.f32 %v1394, 0.0
    %v1411 = vmax.f32 %v1395, 0.0
    %v1412 = vmax.f32 %v1396, 0.0
    %v1413 = vmax.f32 %v1397, 0.0
    %v1414 = vmax.f32 %v1398, 0.0
    %v1415 = vmax.f32 %v1399, 0.0
    %v1416 = vmax.f32 %v1400, 0.0
    %v1417 = vmax.f32 %v1401, 0.0
    %v1418 = vmax.f32 %v1402, 0.0
    %v1419 = vmax.f32 %v1403, 0.0
    %v1420 = vmax.f32 %v1404, 0.0
    %v1421 = vmax.f32 %v1405, 0.0
    %v1422 = vmax.f32 %v1406, 0.0
    %v1423 = vmax.f32 %v1407, 0.0
    %1424 = vst.msk [vmem:[%s112 + $0x1] sm:$0xff] %vm44, %v1408
    %1425 = vst.msk [vmem:[%s112 + $0x11] sm:$0xff] %vm44, %v1409
    %1426 = vst.msk [vmem:[%s112 + $0x21] sm:$0xff] %vm44, %v1410
    %1427 = vst.msk [vmem:[%s112 + $0x31] sm:$0xff] %vm44, %v1411
    %1428 = vst.msk [vmem:[%s112 + $0x41] sm:$0xff] %vm44, %v1412
    %1429 = vst.msk [vmem:[%s112 + $0x51] sm:$0xff] %vm44, %v1413
    %1430 = vst.msk [vmem:[%s112 + $0x61] sm:$0xff] %vm44, %v1414
    %1431 = vst.msk [vmem:[%s112 + $0x71] sm:$0xff] %vm44, %v1415
    %1432 = vst.msk [vmem:[%s112 + $0xa1] sm:$0xff] %vm44, %v1416
    %1433 = vst.msk [vmem:[%s112 + $0xb1] sm:$0xff] %vm44, %v1417
    %1434 = vst.msk [vmem:[%s112 + $0xc1] sm:$0xff] %vm44, %v1418
    %1435 = vst.msk [vmem:[%s112 + $0xd1] sm:$0xff] %vm44, %v1419
    %1436 = vst.msk [vmem:[%s112 + $0xe1] sm:$0xff] %vm44, %v1420
    %1437 = vst.msk [vmem:[%s112 + $0xf1] sm:$0xff] %vm44, %v1421
    %1438 = vst.msk [vmem:[%s112 + $0x101] sm:$0xff] %vm44, %v1422
    %1439 = vst.msk [vmem:[%s112 + $0x111] sm:$0xff] %vm44, %v1423
    %v1440 = vld [vmem:[#allocation2] sm:$0xff]
    %v1441 = vld [vmem:[#allocation2 + $0x10] sm:$0xff]
    %v1442 = vld [vmem:[#allocation2 + $0x20] sm:$0xff]
    %v1443 = vld [vmem:[#allocation2 + $0x30] sm:$0xff]
    %v1444 = vld [vmem:[#allocation2 + $0x40] sm:$0xff]
    %v1445 = vld [vmem:[#allocation2 + $0x50] sm:$0xff]
    %v1446 = vld [vmem:[#allocation2 + $0x60] sm:$0xff]
    %v1447 = vld [vmem:[#allocation2 + $0x70] sm:$0xff]
    %v1448 = vld [vmem:[#allocation2 + $0xa0] sm:$0xff]
    %v1449 = vld [vmem:[#allocation2 + $0xb0] sm:$0xff]
    %v1450 = vld [vmem:[#allocation2 + $0xc0] sm:$0xff]
    %v1451 = vld [vmem:[#allocation2 + $0xd0] sm:$0xff]
    %v1452 = vld [vmem:[#allocation2 + $0xe0] sm:$0xff]
    %v1453 = vld [vmem:[#allocation2 + $0xf0] sm:$0xff]
    %v1454 = vld [vmem:[#allocation2 + $0x100] sm:$0xff]
    %v1455 = vld [vmem:[#allocation2 + $0x110] sm:$0xff]
    %v1456 = vpack.c.bf16 %v1440, %v1440
    %v1457 = vpack.c.bf16 %v1441, %v1441
    %v1458 = vpack.c.bf16 %v1442, %v1442
    %v1459 = vpack.c.bf16 %v1443, %v1443
    %v1460 = vpack.c.bf16 %v1444, %v1444
    %v1461 = vpack.c.bf16 %v1445, %v1445
    %v1462 = vpack.c.bf16 %v1446, %v1446
    %v1463 = vpack.c.bf16 %v1447, %v1447
    %v1464 = vpack.c.bf16 %v1448, %v1448
    %v1465 = vpack.c.bf16 %v1449, %v1449
    %v1466 = vpack.c.bf16 %v1450, %v1450
    %v1467 = vpack.c.bf16 %v1451, %v1451
    %v1468 = vpack.c.bf16 %v1452, %v1452
    %v1469 = vpack.c.bf16 %v1453, %v1453
    %v1470 = vpack.c.bf16 %v1454, %v1454
    %v1471 = vpack.c.bf16 %v1455, %v1455
    %1472 = vst.msk [vmem:[#allocation3] sm:$0xf] %vm161, %v1456
    %1473 = vst.msk [vmem:[#allocation3 + $0x4] sm:$0xf] %vm161, %v1457
    %1474 = vst.msk [vmem:[#allocation3 + $0x8] sm:$0xf] %vm161, %v1458
    %1475 = vst.msk [vmem:[#allocation3 + $0xc] sm:$0xf] %vm161, %v1459
    %1476 = vst.msk [vmem:[#allocation3 + $0x10] sm:$0xf] %vm161, %v1460
    %1477 = vst.msk [vmem:[#allocation3 + $0x14] sm:$0xf] %vm161, %v1461
    %1478 = vst.msk [vmem:[#allocation3 + $0x18] sm:$0xf] %vm161, %v1462
    %1479 = vst.msk [vmem:[#allocation3 + $0x1c] sm:$0xf] %vm161, %v1463
    %1480 = vst.msk [vmem:[#allocation3 + $0x20] sm:$0xf] %vm161, %v1464
    %1481 = vst.msk [vmem:[#allocation3 + $0x24] sm:$0xf] %vm161, %v1465
    %1482 = vst.msk [vmem:[#allocation3 + $0x28] sm:$0xf] %vm161, %v1466
    %1483 = vst.msk [vmem:[#allocation3 + $0x2c] sm:$0xf] %vm161, %v1467
    %1484 = vst.msk [vmem:[#allocation3 + $0x30] sm:$0xf] %vm161, %v1468
    %1485 = vst.msk [vmem:[#allocation3 + $0x34] sm:$0xf] %vm161, %v1469
    %1486 = vst.msk [vmem:[#allocation3 + $0x38] sm:$0xf] %vm161, %v1470
    %1487 = vst.msk [vmem:[#allocation3 + $0x3c] sm:$0xf] %vm161, %v1471
    %v1488 = vld [vmem:[#allocation2 + $0x1] sm:$0xff]
    %v1489 = vld [vmem:[#allocation2 + $0x11] sm:$0xff]
    %v1490 = vld [vmem:[#allocation2 + $0x21] sm:$0xff]
    %v1491 = vld [vmem:[#allocation2 + $0x31] sm:$0xff]
    %v1492 = vld [vmem:[#allocation2 + $0x41] sm:$0xff]
    %v1493 = vld [vmem:[#allocation2 + $0x51] sm:$0xff]
    %v1494 = vld [vmem:[#allocation2 + $0x61] sm:$0xff]
    %v1495 = vld [vmem:[#allocation2 + $0x71] sm:$0xff]
    %v1496 = vld [vmem:[#allocation2 + $0xa1] sm:$0xff]
    %v1497 = vld [vmem:[#allocation2 + $0xb1] sm:$0xff]
    %v1498 = vld [vmem:[#allocation2 + $0xc1] sm:$0xff]
    %v1499 = vld [vmem:[#allocation2 + $0xd1] sm:$0xff]
    %v1500 = vld [vmem:[#allocation2 + $0xe1] sm:$0xff]
    %v1501 = vld [vmem:[#allocation2 + $0xf1] sm:$0xff]
    %v1502 = vld [vmem:[#allocation2 + $0x101] sm:$0xff]
    %v1503 = vld [vmem:[#allocation2 + $0x111] sm:$0xff]
    %v1504 = vpack.c.bf16 %v1488, %v1488
    %v1505 = vpack.c.bf16 %v1489, %v1489
    %v1506 = vpack.c.bf16 %v1490, %v1490
    %v1507 = vpack.c.bf16 %v1491, %v1491
    %v1508 = vpack.c.bf16 %v1492, %v1492
    %v1509 = vpack.c.bf16 %v1493, %v1493
    %v1510 = vpack.c.bf16 %v1494, %v1494
    %v1511 = vpack.c.bf16 %v1495, %v1495
    %v1512 = vpack.c.bf16 %v1496, %v1496
    %v1513 = vpack.c.bf16 %v1497, %v1497
    %v1514 = vpack.c.bf16 %v1498, %v1498
    %v1515 = vpack.c.bf16 %v1499, %v1499
    %v1516 = vpack.c.bf16 %v1500, %v1500
    %v1517 = vpack.c.bf16 %v1501, %v1501
    %v1518 = vpack.c.bf16 %v1502, %v1502
    %v1519 = vpack.c.bf16 %v1503, %v1503
    %1536 = vrot.lane.b32.xlu0 %v1504, 8
    %v1537 = vpop.permute.xlu0 %1536
    %1538 = vrot.lane.b32.xlu0 %v1505, 8
    %v1539 = vpop.permute.xlu0 %1538
    %1540 = vrot.lane.b32.xlu0 %v1506, 8
    %v1541 = vpop.permute.xlu0 %1540
    %1542 = vrot.lane.b32.xlu0 %v1507, 8
    %v1543 = vpop.permute.xlu0 %1542
    %1544 = vrot.lane.b32.xlu0 %v1508, 8
    %v1545 = vpop.permute.xlu0 %1544
    %1546 = vrot.lane.b32.xlu0 %v1509, 8
    %v1547 = vpop.permute.xlu0 %1546
    %1548 = vrot.lane.b32.xlu0 %v1510, 8
    %v1549 = vpop.permute.xlu0 %1548
    %1550 = vrot.lane.b32.xlu0 %v1511, 8
    %v1551 = vpop.permute.xlu0 %1550
    %1552 = vrot.lane.b32.xlu0 %v1512, 8
    %v1553 = vpop.permute.xlu0 %1552
    %1554 = vrot.lane.b32.xlu0 %v1513, 8
    %v1555 = vpop.permute.xlu0 %1554
    %1556 = vrot.lane.b32.xlu0 %v1514, 8
    %v1557 = vpop.permute.xlu0 %1556
    %1558 = vrot.lane.b32.xlu0 %v1515, 8
    %v1559 = vpop.permute.xlu0 %1558
    %1560 = vrot.lane.b32.xlu0 %v1516, 8
    %v1561 = vpop.permute.xlu0 %1560
    %1562 = vrot.lane.b32.xlu0 %v1517, 8
    %v1563 = vpop.permute.xlu0 %1562
    %1564 = vrot.lane.b32.xlu0 %v1518, 8
    %v1565 = vpop.permute.xlu0 %1564
    %1566 = vrot.lane.b32.xlu0 %v1519, 8
    %v1567 = vpop.permute.xlu0 %1566
    %1584 = vst.msk [vmem:[#allocation3] sm:$0xf] %vm274, %v1537
    %1585 = vst.msk [vmem:[#allocation3 + $0x4] sm:$0xf] %vm274, %v1539
    %1586 = vst.msk [vmem:[#allocation3 + $0x8] sm:$0xf] %vm274, %v1541
    %1587 = vst.msk [vmem:[#allocation3 + $0xc] sm:$0xf] %vm274, %v1543
    %1588 = vst.msk [vmem:[#allocation3 + $0x10] sm:$0xf] %vm274, %v1545
    %1589 = vst.msk [vmem:[#allocation3 + $0x14] sm:$0xf] %vm274, %v1547
    %1590 = vst.msk [vmem:[#allocation3 + $0x18] sm:$0xf] %vm274, %v1549
    %1591 = vst.msk [vmem:[#allocation3 + $0x1c] sm:$0xf] %vm274, %v1551
    %1592 = vst.msk [vmem:[#allocation3 + $0x20] sm:$0xf] %vm274, %v1553
    %1593 = vst.msk [vmem:[#allocation3 + $0x24] sm:$0xf] %vm274, %v1555
    %1594 = vst.msk [vmem:[#allocation3 + $0x28] sm:$0xf] %vm274, %v1557
    %1595 = vst.msk [vmem:[#allocation3 + $0x2c] sm:$0xf] %vm274, %v1559
    %1596 = vst.msk [vmem:[#allocation3 + $0x30] sm:$0xf] %vm274, %v1561
    %1597 = vst.msk [vmem:[#allocation3 + $0x34] sm:$0xf] %vm274, %v1563
    %1598 = vst.msk [vmem:[#allocation3 + $0x38] sm:$0xf] %vm274, %v1565
    %1599 = vst.msk [vmem:[#allocation3 + $0x3c] sm:$0xf] %vm274, %v1567
    %v1600 = vld [vmem:[#allocation2 + $0x2] sm:$0xff]
    %v1601 = vld [vmem:[#allocation2 + $0x12] sm:$0xff]
    %v1602 = vld [vmem:[#allocation2 + $0x22] sm:$0xff]
    %v1603 = vld [vmem:[#allocation2 + $0x32] sm:$0xff]
    %v1604 = vld [vmem:[#allocation2 + $0x42] sm:$0xff]
    %v1605 = vld [vmem:[#allocation2 + $0x52] sm:$0xff]
    %v1606 = vld [vmem:[#allocation2 + $0x62] sm:$0xff]
    %v1607 = vld [vmem:[#allocation2 + $0x72] sm:$0xff]
    %v1608 = vld [vmem:[#allocation2 + $0xa2] sm:$0xff]
    %v1609 = vld [vmem:[#allocation2 + $0xb2] sm:$0xff]
    %v1610 = vld [vmem:[#allocation2 + $0xc2] sm:$0xff]
    %v1611 = vld [vmem:[#allocation2 + $0xd2] sm:$0xff]
    %v1612 = vld [vmem:[#allocation2 + $0xe2] sm:$0xff]
    %v1613 = vld [vmem:[#allocation2 + $0xf2] sm:$0xff]
    %v1614 = vld [vmem:[#allocation2 + $0x102] sm:$0xff]
    %v1615 = vld [vmem:[#allocation2 + $0x112] sm:$0xff]
    %v1616 = vpack.c.bf16 %v1600, %v1600
    %v1617 = vpack.c.bf16 %v1601, %v1601
    %v1618 = vpack.c.bf16 %v1602, %v1602
    %v1619 = vpack.c.bf16 %v1603, %v1603
    %v1620 = vpack.c.bf16 %v1604, %v1604
    %v1621 = vpack.c.bf16 %v1605, %v1605
    %v1622 = vpack.c.bf16 %v1606, %v1606
    %v1623 = vpack.c.bf16 %v1607, %v1607
    %v1624 = vpack.c.bf16 %v1608, %v1608
    %v1625 = vpack.c.bf16 %v1609, %v1609
    %v1626 = vpack.c.bf16 %v1610, %v1610
    %v1627 = vpack.c.bf16 %v1611, %v1611
    %v1628 = vpack.c.bf16 %v1612, %v1612
    %v1629 = vpack.c.bf16 %v1613, %v1613
    %v1630 = vpack.c.bf16 %v1614, %v1614
    %v1631 = vpack.c.bf16 %v1615, %v1615
    %1648 = vrot.lane.b32.xlu0 %v1616, 16
    %v1649 = vpop.permute.xlu0 %1648
    %1650 = vrot.lane.b32.xlu0 %v1617, 16
    %v1651 = vpop.permute.xlu0 %1650
    %1652 = vrot.lane.b32.xlu0 %v1618, 16
    %v1653 = vpop.permute.xlu0 %1652
    %1654 = vrot.lane.b32.xlu0 %v1619, 16
    %v1655 = vpop.permute.xlu0 %1654
    %1656 = vrot.lane.b32.xlu0 %v1620, 16
    %v1657 = vpop.permute.xlu0 %1656
    %1658 = vrot.lane.b32.xlu0 %v1621, 16
    %v1659 = vpop.permute.xlu0 %1658
    %1660 = vrot.lane.b32.xlu0 %v1622, 16
    %v1661 = vpop.permute.xlu0 %1660
    %1662 = vrot.lane.b32.xlu0 %v1623, 16
    %v1663 = vpop.permute.xlu0 %1662
    %1664 = vrot.lane.b32.xlu0 %v1624, 16
    %v1665 = vpop.permute.xlu0 %1664
    %1666 = vrot.lane.b32.xlu0 %v1625, 16
    %v1667 = vpop.permute.xlu0 %1666
    %1668 = vrot.lane.b32.xlu0 %v1626, 16
    %v1669 = vpop.permute.xlu0 %1668
    %1670 = vrot.lane.b32.xlu0 %v1627, 16
    %v1671 = vpop.permute.xlu0 %1670
    %1672 = vrot.lane.b32.xlu0 %v1628, 16
    %v1673 = vpop.permute.xlu0 %1672
    %1674 = vrot.lane.b32.xlu0 %v1629, 16
    %v1675 = vpop.permute.xlu0 %1674
    %1676 = vrot.lane.b32.xlu0 %v1630, 16
    %v1677 = vpop.permute.xlu0 %1676
    %1678 = vrot.lane.b32.xlu0 %v1631, 16
    %v1679 = vpop.permute.xlu0 %1678
    %1696 = vst.msk [vmem:[#allocation3] sm:$0xf] %vm387, %v1649
    %1697 = vst.msk [vmem:[#allocation3 + $0x4] sm:$0xf] %vm387, %v1651
    %1698 = vst.msk [vmem:[#allocation3 + $0x8] sm:$0xf] %vm387, %v1653
    %1699 = vst.msk [vmem:[#allocation3 + $0xc] sm:$0xf] %vm387, %v1655
    %1700 = vst.msk [vmem:[#allocation3 + $0x10] sm:$0xf] %vm387, %v1657
    %1701 = vst.msk [vmem:[#allocation3 + $0x14] sm:$0xf] %vm387, %v1659
    %1702 = vst.msk [vmem:[#allocation3 + $0x18] sm:$0xf] %vm387, %v1661
    %1703 = vst.msk [vmem:[#allocation3 + $0x1c] sm:$0xf] %vm387, %v1663
    %1704 = vst.msk [vmem:[#allocation3 + $0x20] sm:$0xf] %vm387, %v1665
    %1705 = vst.msk [vmem:[#allocation3 + $0x24] sm:$0xf] %vm387, %v1667
    %1706 = vst.msk [vmem:[#allocation3 + $0x28] sm:$0xf] %vm387, %v1669
    %1707 = vst.msk [vmem:[#allocation3 + $0x2c] sm:$0xf] %vm387, %v1671
    %1708 = vst.msk [vmem:[#allocation3 + $0x30] sm:$0xf] %vm387, %v1673
    %1709 = vst.msk [vmem:[#allocation3 + $0x34] sm:$0xf] %vm387, %v1675
    %1710 = vst.msk [vmem:[#allocation3 + $0x38] sm:$0xf] %vm387, %v1677
    %1711 = vst.msk [vmem:[#allocation3 + $0x3c] sm:$0xf] %vm387, %v1679
    %v1712 = vld [vmem:[%s112] sm:$0xff]
    %v1713 = vld [vmem:[%s112 + $0x10] sm:$0xff]
    %v1714 = vld [vmem:[%s112 + $0x20] sm:$0xff]
    %v1715 = vld [vmem:[%s112 + $0x30] sm:$0xff]
    %v1716 = vld [vmem:[%s112 + $0x40] sm:$0xff]
    %v1717 = vld [vmem:[%s112 + $0x50] sm:$0xff]
    %v1718 = vld [vmem:[%s112 + $0x60] sm:$0xff]
    %v1719 = vld [vmem:[%s112 + $0x70] sm:$0xff]
    %v1720 = vld [vmem:[%s112 + $0xa0] sm:$0xff]
    %v1721 = vld [vmem:[%s112 + $0xb0] sm:$0xff]
    %v1722 = vld [vmem:[%s112 + $0xc0] sm:$0xff]
    %v1723 = vld [vmem:[%s112 + $0xd0] sm:$0xff]
    %v1724 = vld [vmem:[%s112 + $0xe0] sm:$0xff]
    %v1725 = vld [vmem:[%s112 + $0xf0] sm:$0xff]
    %v1726 = vld [vmem:[%s112 + $0x100] sm:$0xff]
    %v1727 = vld [vmem:[%s112 + $0x110] sm:$0xff]
    %v1728 = vpack.c.bf16 %v1712, %v1712
    %v1729 = vpack.c.bf16 %v1713, %v1713
    %v1730 = vpack.c.bf16 %v1714, %v1714
    %v1731 = vpack.c.bf16 %v1715, %v1715
    %v1732 = vpack.c.bf16 %v1716, %v1716
    %v1733 = vpack.c.bf16 %v1717, %v1717
    %v1734 = vpack.c.bf16 %v1718, %v1718
    %v1735 = vpack.c.bf16 %v1719, %v1719
    %v1736 = vpack.c.bf16 %v1720, %v1720
    %v1737 = vpack.c.bf16 %v1721, %v1721
    %v1738 = vpack.c.bf16 %v1722, %v1722
    %v1739 = vpack.c.bf16 %v1723, %v1723
    %v1740 = vpack.c.bf16 %v1724, %v1724
    %v1741 = vpack.c.bf16 %v1725, %v1725
    %v1742 = vpack.c.bf16 %v1726, %v1726
    %v1743 = vpack.c.bf16 %v1727, %v1727
    %1760 = vrot.lane.b32.xlu0 %v1728, 24
    %v1761 = vpop.permute.xlu0 %1760
    %1762 = vrot.lane.b32.xlu0 %v1729, 24
    %v1763 = vpop.permute.xlu0 %1762
    %1764 = vrot.lane.b32.xlu0 %v1730, 24
    %v1765 = vpop.permute.xlu0 %1764
    %1766 = vrot.lane.b32.xlu0 %v1731, 24
    %v1767 = vpop.permute.xlu0 %1766
    %1768 = vrot.lane.b32.xlu0 %v1732, 24
    %v1769 = vpop.permute.xlu0 %1768
    %1770 = vrot.lane.b32.xlu0 %v1733, 24
    %v1771 = vpop.permute.xlu0 %1770
    %1772 = vrot.lane.b32.xlu0 %v1734, 24
    %v1773 = vpop.permute.xlu0 %1772
    %1774 = vrot.lane.b32.xlu0 %v1735, 24
    %v1775 = vpop.permute.xlu0 %1774
    %1776 = vrot.lane.b32.xlu0 %v1736, 24
    %v1777 = vpop.permute.xlu0 %1776
    %1778 = vrot.lane.b32.xlu0 %v1737, 24
    %v1779 = vpop.permute.xlu0 %1778
    %1780 = vrot.lane.b32.xlu0 %v1738, 24
    %v1781 = vpop.permute.xlu0 %1780
    %1782 = vrot.lane.b32.xlu0 %v1739, 24
    %v1783 = vpop.permute.xlu0 %1782
    %1784 = vrot.lane.b32.xlu0 %v1740, 24
    %v1785 = vpop.permute.xlu0 %1784
    %1786 = vrot.lane.b32.xlu0 %v1741, 24
    %v1787 = vpop.permute.xlu0 %1786
    %1788 = vrot.lane.b32.xlu0 %v1742, 24
    %v1789 = vpop.permute.xlu0 %1788
    %1790 = vrot.lane.b32.xlu0 %v1743, 24
    %v1791 = vpop.permute.xlu0 %1790
    %1808 = vst.msk [vmem:[#allocation3] sm:$0xf] %vm500, %v1761
    %1809 = vst.msk [vmem:[#allocation3 + $0x4] sm:$0xf] %vm500, %v1763
    %1810 = vst.msk [vmem:[#allocation3 + $0x8] sm:$0xf] %vm500, %v1765
    %1811 = vst.msk [vmem:[#allocation3 + $0xc] sm:$0xf] %vm500, %v1767
    %1812 = vst.msk [vmem:[#allocation3 + $0x10] sm:$0xf] %vm500, %v1769
    %1813 = vst.msk [vmem:[#allocation3 + $0x14] sm:$0xf] %vm500, %v1771
    %1814 = vst.msk [vmem:[#allocation3 + $0x18] sm:$0xf] %vm500, %v1773
    %1815 = vst.msk [vmem:[#allocation3 + $0x1c] sm:$0xf] %vm500, %v1775
    %1816 = vst.msk [vmem:[#allocation3 + $0x20] sm:$0xf] %vm500, %v1777
    %1817 = vst.msk [vmem:[#allocation3 + $0x24] sm:$0xf] %vm500, %v1779
    %1818 = vst.msk [vmem:[#allocation3 + $0x28] sm:$0xf] %vm500, %v1781
    %1819 = vst.msk [vmem:[#allocation3 + $0x2c] sm:$0xf] %vm500, %v1783
    %1820 = vst.msk [vmem:[#allocation3 + $0x30] sm:$0xf] %vm500, %v1785
    %1821 = vst.msk [vmem:[#allocation3 + $0x34] sm:$0xf] %vm500, %v1787
    %1822 = vst.msk [vmem:[#allocation3 + $0x38] sm:$0xf] %vm500, %v1789
    %1823 = vst.msk [vmem:[#allocation3 + $0x3c] sm:$0xf] %vm500, %v1791
    %v1824 = vld [vmem:[%s112 + $0x1] sm:$0xff]
    %v1825 = vld [vmem:[%s112 + $0x11] sm:$0xff]
    %v1826 = vld [vmem:[%s112 + $0x21] sm:$0xff]
    %v1827 = vld [vmem:[%s112 + $0x31] sm:$0xff]
    %v1828 = vld [vmem:[%s112 + $0x41] sm:$0xff]
    %v1829 = vld [vmem:[%s112 + $0x51] sm:$0xff]
    %v1830 = vld [vmem:[%s112 + $0x61] sm:$0xff]
    %v1831 = vld [vmem:[%s112 + $0x71] sm:$0xff]
    %v1832 = vld [vmem:[%s112 + $0xa1] sm:$0xff]
    %v1833 = vld [vmem:[%s112 + $0xb1] sm:$0xff]
    %v1834 = vld [vmem:[%s112 + $0xc1] sm:$0xff]
    %v1835 = vld [vmem:[%s112 + $0xd1] sm:$0xff]
    %v1836 = vld [vmem:[%s112 + $0xe1] sm:$0xff]
    %v1837 = vld [vmem:[%s112 + $0xf1] sm:$0xff]
    %v1838 = vld [vmem:[%s112 + $0x101] sm:$0xff]
    %v1839 = vld [vmem:[%s112 + $0x111] sm:$0xff]
    %v1840 = vpack.c.bf16 %v1824, %v1824
    %v1841 = vpack.c.bf16 %v1825, %v1825
    %v1842 = vpack.c.bf16 %v1826, %v1826
    %v1843 = vpack.c.bf16 %v1827, %v1827
    %v1844 = vpack.c.bf16 %v1828, %v1828
    %v1845 = vpack.c.bf16 %v1829, %v1829
    %v1846 = vpack.c.bf16 %v1830, %v1830
    %v1847 = vpack.c.bf16 %v1831, %v1831
    %v1848 = vpack.c.bf16 %v1832, %v1832
    %v1849 = vpack.c.bf16 %v1833, %v1833
    %v1850 = vpack.c.bf16 %v1834, %v1834
    %v1851 = vpack.c.bf16 %v1835, %v1835
    %v1852 = vpack.c.bf16 %v1836, %v1836
    %v1853 = vpack.c.bf16 %v1837, %v1837
    %v1854 = vpack.c.bf16 %v1838, %v1838
    %v1855 = vpack.c.bf16 %v1839, %v1839
    %1872 = vrot.lane.b32.xlu0 %v1840, 32
    %v1873 = vpop.permute.xlu0 %1872
    %1874 = vrot.lane.b32.xlu0 %v1841, 32
    %v1875 = vpop.permute.xlu0 %1874
    %1876 = vrot.lane.b32.xlu0 %v1842, 32
    %v1877 = vpop.permute.xlu0 %1876
    %1878 = vrot.lane.b32.xlu0 %v1843, 32
    %v1879 = vpop.permute.xlu0 %1878
    %1880 = vrot.lane.b32.xlu0 %v1844, 32
    %v1881 = vpop.permute.xlu0 %1880
    %1882 = vrot.lane.b32.xlu0 %v1845, 32
    %v1883 = vpop.permute.xlu0 %1882
    %1884 = vrot.lane.b32.xlu0 %v1846, 32
    %v1885 = vpop.permute.xlu0 %1884
    %1886 = vrot.lane.b32.xlu0 %v1847, 32
    %v1887 = vpop.permute.xlu0 %1886
    %1888 = vrot.lane.b32.xlu0 %v1848, 32
    %v1889 = vpop.permute.xlu0 %1888
    %1890 = vrot.lane.b32.xlu0 %v1849, 32
    %v1891 = vpop.permute.xlu0 %1890
    %1892 = vrot.lane.b32.xlu0 %v1850, 32
    %v1893 = vpop.permute.xlu0 %1892
    %1894 = vrot.lane.b32.xlu0 %v1851, 32
    %v1895 = vpop.permute.xlu0 %1894
    %1896 = vrot.lane.b32.xlu0 %v1852, 32
    %v1897 = vpop.permute.xlu0 %1896
    %1898 = vrot.lane.b32.xlu0 %v1853, 32
    %v1899 = vpop.permute.xlu0 %1898
    %1900 = vrot.lane.b32.xlu0 %v1854, 32
    %v1901 = vpop.permute.xlu0 %1900
    %1902 = vrot.lane.b32.xlu0 %v1855, 32
    %v1903 = vpop.permute.xlu0 %1902
    %1920 = vst.msk [vmem:[#allocation3] sm:$0xf] %vm613, %v1873
    %1921 = vst.msk [vmem:[#allocation3 + $0x4] sm:$0xf] %vm613, %v1875
    %1922 = vst.msk [vmem:[#allocation3 + $0x8] sm:$0xf] %vm613, %v1877
    %1923 = vst.msk [vmem:[#allocation3 + $0xc] sm:$0xf] %vm613, %v1879
    %1924 = vst.msk [vmem:[#allocation3 + $0x10] sm:$0xf] %vm613, %v1881
    %1925 = vst.msk [vmem:[#allocation3 + $0x14] sm:$0xf] %vm613, %v1883
    %1926 = vst.msk [vmem:[#allocation3 + $0x18] sm:$0xf] %vm613, %v1885
    %1927 = vst.msk [vmem:[#allocation3 + $0x1c] sm:$0xf] %vm613, %v1887
    %1928 = vst.msk [vmem:[#allocation3 + $0x20] sm:$0xf] %vm613, %v1889
    %1929 = vst.msk [vmem:[#allocation3 + $0x24] sm:$0xf] %vm613, %v1891
    %1930 = vst.msk [vmem:[#allocation3 + $0x28] sm:$0xf] %vm613, %v1893
    %1931 = vst.msk [vmem:[#allocation3 + $0x2c] sm:$0xf] %vm613, %v1895
    %1932 = vst.msk [vmem:[#allocation3 + $0x30] sm:$0xf] %vm613, %v1897
    %1933 = vst.msk [vmem:[#allocation3 + $0x34] sm:$0xf] %vm613, %v1899
    %1934 = vst.msk [vmem:[#allocation3 + $0x38] sm:$0xf] %vm613, %v1901
    %1935 = vst.msk [vmem:[#allocation3 + $0x3c] sm:$0xf] %vm613, %v1903
    %v1936 = vld [vmem:[%s112 + $0x2] sm:$0xff]
    %v1937 = vld [vmem:[%s112 + $0x12] sm:$0xff]
    %v1938 = vld [vmem:[%s112 + $0x22] sm:$0xff]
    %v1939 = vld [vmem:[%s112 + $0x32] sm:$0xff]
    %v1940 = vld [vmem:[%s112 + $0x42] sm:$0xff]
    %v1941 = vld [vmem:[%s112 + $0x52] sm:$0xff]
    %v1942 = vld [vmem:[%s112 + $0x62] sm:$0xff]
    %v1943 = vld [vmem:[%s112 + $0x72] sm:$0xff]
    %v1944 = vld [vmem:[%s112 + $0xa2] sm:$0xff]
    %v1945 = vld [vmem:[%s112 + $0xb2] sm:$0xff]
    %v1946 = vld [vmem:[%s112 + $0xc2] sm:$0xff]
    %v1947 = vld [vmem:[%s112 + $0xd2] sm:$0xff]
    %v1948 = vld [vmem:[%s112 + $0xe2] sm:$0xff]
    %v1949 = vld [vmem:[%s112 + $0xf2] sm:$0xff]
    %v1950 = vld [vmem:[%s112 + $0x102] sm:$0xff]
    %v1951 = vld [vmem:[%s112 + $0x112] sm:$0xff]
    %v1952 = vpack.c.bf16 %v1936, %v1936
    %v1953 = vpack.c.bf16 %v1937, %v1937
    %v1954 = vpack.c.bf16 %v1938, %v1938
    %v1955 = vpack.c.bf16 %v1939, %v1939
    %v1956 = vpack.c.bf16 %v1940, %v1940
    %v1957 = vpack.c.bf16 %v1941, %v1941
    %v1958 = vpack.c.bf16 %v1942, %v1942
    %v1959 = vpack.c.bf16 %v1943, %v1943
    %v1960 = vpack.c.bf16 %v1944, %v1944
    %v1961 = vpack.c.bf16 %v1945, %v1945
    %v1962 = vpack.c.bf16 %v1946, %v1946
    %v1963 = vpack.c.bf16 %v1947, %v1947
    %v1964 = vpack.c.bf16 %v1948, %v1948
    %v1965 = vpack.c.bf16 %v1949, %v1949
    %v1966 = vpack.c.bf16 %v1950, %v1950
    %v1967 = vpack.c.bf16 %v1951, %v1951
    %1984 = vrot.lane.b32.xlu0 %v1952, 40
    %v1985 = vpop.permute.xlu0 %1984
    %1986 = vrot.lane.b32.xlu0 %v1953, 40
    %v1987 = vpop.permute.xlu0 %1986
    %1988 = vrot.lane.b32.xlu0 %v1954, 40
    %v1989 = vpop.permute.xlu0 %1988
    %1990 = vrot.lane.b32.xlu0 %v1955, 40
    %v1991 = vpop.permute.xlu0 %1990
    %1992 = vrot.lane.b32.xlu0 %v1956, 40
    %v1993 = vpop.permute.xlu0 %1992
    %1994 = vrot.lane.b32.xlu0 %v1957, 40
    %v1995 = vpop.permute.xlu0 %1994
    %1996 = vrot.lane.b32.xlu0 %v1958, 40
    %v1997 = vpop.permute.xlu0 %1996
    %1998 = vrot.lane.b32.xlu0 %v1959, 40
    %v1999 = vpop.permute.xlu0 %1998
    %2000 = vrot.lane.b32.xlu0 %v1960, 40
    %v2001 = vpop.permute.xlu0 %2000
    %2002 = vrot.lane.b32.xlu0 %v1961, 40
    %v2003 = vpop.permute.xlu0 %2002
    %2004 = vrot.lane.b32.xlu0 %v1962, 40
    %v2005 = vpop.permute.xlu0 %2004
    %2006 = vrot.lane.b32.xlu0 %v1963, 40
    %v2007 = vpop.permute.xlu0 %2006
    %2008 = vrot.lane.b32.xlu0 %v1964, 40
    %v2009 = vpop.permute.xlu0 %2008
    %2010 = vrot.lane.b32.xlu0 %v1965, 40
    %v2011 = vpop.permute.xlu0 %2010
    %2012 = vrot.lane.b32.xlu0 %v1966, 40
    %v2013 = vpop.permute.xlu0 %2012
    %2014 = vrot.lane.b32.xlu0 %v1967, 40
    %v2015 = vpop.permute.xlu0 %2014
    %2032 = vst.msk [vmem:[#allocation3] sm:$0xf] %vm726, %v1985
    %2033 = vst.msk [vmem:[#allocation3 + $0x4] sm:$0xf] %vm726, %v1987
    %2034 = vst.msk [vmem:[#allocation3 + $0x8] sm:$0xf] %vm726, %v1989
    %2035 = vst.msk [vmem:[#allocation3 + $0xc] sm:$0xf] %vm726, %v1991
    %2036 = vst.msk [vmem:[#allocation3 + $0x10] sm:$0xf] %vm726, %v1993
    %2037 = vst.msk [vmem:[#allocation3 + $0x14] sm:$0xf] %vm726, %v1995
    %2038 = vst.msk [vmem:[#allocation3 + $0x18] sm:$0xf] %vm726, %v1997
    %2039 = vst.msk [vmem:[#allocation3 + $0x1c] sm:$0xf] %vm726, %v1999
    %2040 = vst.msk [vmem:[#allocation3 + $0x20] sm:$0xf] %vm726, %v2001
    %2041 = vst.msk [vmem:[#allocation3 + $0x24] sm:$0xf] %vm726, %v2003
    %2042 = vst.msk [vmem:[#allocation3 + $0x28] sm:$0xf] %vm726, %v2005
    %2043 = vst.msk [vmem:[#allocation3 + $0x2c] sm:$0xf] %vm726, %v2007
    %2044 = vst.msk [vmem:[#allocation3 + $0x30] sm:$0xf] %vm726, %v2009
    %2045 = vst.msk [vmem:[#allocation3 + $0x34] sm:$0xf] %vm726, %v2011
    %2046 = vst.msk [vmem:[#allocation3 + $0x38] sm:$0xf] %vm726, %v2013
    %2047 = vst.msk [vmem:[#allocation3 + $0x3c] sm:$0xf] %vm726, %v2015
    %v2048 = vld [vmem:[%s743] sm:$0xff]
    %v2049 = vld [vmem:[%s743 + $0x10] sm:$0xff]
    %v2050 = vld [vmem:[%s743 + $0x20] sm:$0xff]
    %v2051 = vld [vmem:[%s743 + $0x30] sm:$0xff]
    %v2052 = vld [vmem:[%s743 + $0x40] sm:$0xff]
    %v2053 = vld [vmem:[%s743 + $0x50] sm:$0xff]
    %v2054 = vld [vmem:[%s743 + $0x60] sm:$0xff]
    %v2055 = vld [vmem:[%s743 + $0x70] sm:$0xff]
    %v2056 = vld [vmem:[%s743 + $0xa0] sm:$0xff]
    %v2057 = vld [vmem:[%s743 + $0xb0] sm:$0xff]
    %v2058 = vld [vmem:[%s743 + $0xc0] sm:$0xff]
    %v2059 = vld [vmem:[%s743 + $0xd0] sm:$0xff]
    %v2060 = vld [vmem:[%s743 + $0xe0] sm:$0xff]
    %v2061 = vld [vmem:[%s743 + $0xf0] sm:$0xff]
    %v2062 = vld [vmem:[%s743 + $0x100] sm:$0xff]
    %v2063 = vld [vmem:[%s743 + $0x110] sm:$0xff]
    %v2064 = vpack.c.bf16 %v2048, %v2048
    %v2065 = vpack.c.bf16 %v2049, %v2049
    %v2066 = vpack.c.bf16 %v2050, %v2050
    %v2067 = vpack.c.bf16 %v2051, %v2051
    %v2068 = vpack.c.bf16 %v2052, %v2052
    %v2069 = vpack.c.bf16 %v2053, %v2053
    %v2070 = vpack.c.bf16 %v2054, %v2054
    %v2071 = vpack.c.bf16 %v2055, %v2055
    %v2072 = vpack.c.bf16 %v2056, %v2056
    %v2073 = vpack.c.bf16 %v2057, %v2057
    %v2074 = vpack.c.bf16 %v2058, %v2058
    %v2075 = vpack.c.bf16 %v2059, %v2059
    %v2076 = vpack.c.bf16 %v2060, %v2060
    %v2077 = vpack.c.bf16 %v2061, %v2061
    %v2078 = vpack.c.bf16 %v2062, %v2062
    %v2079 = vpack.c.bf16 %v2063, %v2063
    %2096 = vrot.lane.b32.xlu0 %v2064, 48
    %v2097 = vpop.permute.xlu0 %2096
    %2098 = vrot.lane.b32.xlu0 %v2065, 48
    %v2099 = vpop.permute.xlu0 %2098
    %2100 = vrot.lane.b32.xlu0 %v2066, 48
    %v2101 = vpop.permute.xlu0 %2100
    %2102 = vrot.lane.b32.xlu0 %v2067, 48
    %v2103 = vpop.permute.xlu0 %2102
    %2104 = vrot.lane.b32.xlu0 %v2068, 48
    %v2105 = vpop.permute.xlu0 %2104
    %2106 = vrot.lane.b32.xlu0 %v2069, 48
    %v2107 = vpop.permute.xlu0 %2106
    %2108 = vrot.lane.b32.xlu0 %v2070, 48
    %v2109 = vpop.permute.xlu0 %2108
    %2110 = vrot.lane.b32.xlu0 %v2071, 48
    %v2111 = vpop.permute.xlu0 %2110
    %2112 = vrot.lane.b32.xlu0 %v2072, 48
    %v2113 = vpop.permute.xlu0 %2112
    %2114 = vrot.lane.b32.xlu0 %v2073, 48
    %v2115 = vpop.permute.xlu0 %2114
    %2116 = vrot.lane.b32.xlu0 %v2074, 48
    %v2117 = vpop.permute.xlu0 %2116
    %2118 = vrot.lane.b32.xlu0 %v2075, 48
    %v2119 = vpop.permute.xlu0 %2118
    %2120 = vrot.lane.b32.xlu0 %v2076, 48
    %v2121 = vpop.permute.xlu0 %2120
    %2122 = vrot.lane.b32.xlu0 %v2077, 48
    %v2123 = vpop.permute.xlu0 %2122
    %2124 = vrot.lane.b32.xlu0 %v2078, 48
    %v2125 = vpop.permute.xlu0 %2124
    %2126 = vrot.lane.b32.xlu0 %v2079, 48
    %v2127 = vpop.permute.xlu0 %2126
    %2144 = vst.msk [vmem:[#allocation3] sm:$0xf] %vm840, %v2097
    %2145 = vst.msk [vmem:[#allocation3 + $0x4] sm:$0xf] %vm840, %v2099
    %2146 = vst.msk [vmem:[#allocation3 + $0x8] sm:$0xf] %vm840, %v2101
    %2147 = vst.msk [vmem:[#allocation3 + $0xc] sm:$0xf] %vm840, %v2103
    %2148 = vst.msk [vmem:[#allocation3 + $0x10] sm:$0xf] %vm840, %v2105
    %2149 = vst.msk [vmem:[#allocation3 + $0x14] sm:$0xf] %vm840, %v2107
    %2150 = vst.msk [vmem:[#allocation3 + $0x18] sm:$0xf] %vm840, %v2109
    %2151 = vst.msk [vmem:[#allocation3 + $0x1c] sm:$0xf] %vm840, %v2111
    %2152 = vst.msk [vmem:[#allocation3 + $0x20] sm:$0xf] %vm840, %v2113
    %2153 = vst.msk [vmem:[#allocation3 + $0x24] sm:$0xf] %vm840, %v2115
    %2154 = vst.msk [vmem:[#allocation3 + $0x28] sm:$0xf] %vm840, %v2117
    %2155 = vst.msk [vmem:[#allocation3 + $0x2c] sm:$0xf] %vm840, %v2119
    %2156 = vst.msk [vmem:[#allocation3 + $0x30] sm:$0xf] %vm840, %v2121
    %2157 = vst.msk [vmem:[#allocation3 + $0x34] sm:$0xf] %vm840, %v2123
    %2158 = vst.msk [vmem:[#allocation3 + $0x38] sm:$0xf] %vm840, %v2125
    %2159 = vst.msk [vmem:[#allocation3 + $0x3c] sm:$0xf] %vm840, %v2127
    %v2160 = vld [vmem:[%s743 + $0x1] sm:$0xff]
    %v2161 = vld [vmem:[%s743 + $0x11] sm:$0xff]
    %v2162 = vld [vmem:[%s743 + $0x21] sm:$0xff]
    %v2163 = vld [vmem:[%s743 + $0x31] sm:$0xff]
    %v2164 = vld [vmem:[%s743 + $0x41] sm:$0xff]
    %v2165 = vld [vmem:[%s743 + $0x51] sm:$0xff]
    %v2166 = vld [vmem:[%s743 + $0x61] sm:$0xff]
    %v2167 = vld [vmem:[%s743 + $0x71] sm:$0xff]
    %v2168 = vld [vmem:[%s743 + $0xa1] sm:$0xff]
    %v2169 = vld [vmem:[%s743 + $0xb1] sm:$0xff]
    %v2170 = vld [vmem:[%s743 + $0xc1] sm:$0xff]
    %v2171 = vld [vmem:[%s743 + $0xd1] sm:$0xff]
    %v2172 = vld [vmem:[%s743 + $0xe1] sm:$0xff]
    %v2173 = vld [vmem:[%s743 + $0xf1] sm:$0xff]
    %v2174 = vld [vmem:[%s743 + $0x101] sm:$0xff]
    %v2175 = vld [vmem:[%s743 + $0x111] sm:$0xff]
    %v2176 = vpack.c.bf16 %v2160, %v2160
    %v2177 = vpack.c.bf16 %v2161, %v2161
    %v2178 = vpack.c.bf16 %v2162, %v2162
    %v2179 = vpack.c.bf16 %v2163, %v2163
    %v2180 = vpack.c.bf16 %v2164, %v2164
    %v2181 = vpack.c.bf16 %v2165, %v2165
    %v2182 = vpack.c.bf16 %v2166, %v2166
    %v2183 = vpack.c.bf16 %v2167, %v2167
    %v2184 = vpack.c.bf16 %v2168, %v2168
    %v2185 = vpack.c.bf16 %v2169, %v2169
    %v2186 = vpack.c.bf16 %v2170, %v2170
    %v2187 = vpack.c.bf16 %v2171, %v2171
    %v2188 = vpack.c.bf16 %v2172, %v2172
    %v2189 = vpack.c.bf16 %v2173, %v2173
    %v2190 = vpack.c.bf16 %v2174, %v2174
    %v2191 = vpack.c.bf16 %v2175, %v2175
    %2208 = vrot.lane.b32.xlu0 %v2176, 56
    %v2209 = vpop.permute.xlu0 %2208
    %2210 = vrot.lane.b32.xlu0 %v2177, 56
    %v2211 = vpop.permute.xlu0 %2210
    %2212 = vrot.lane.b32.xlu0 %v2178, 56
    %v2213 = vpop.permute.xlu0 %2212
    %2214 = vrot.lane.b32.xlu0 %v2179, 56
    %v2215 = vpop.permute.xlu0 %2214
    %2216 = vrot.lane.b32.xlu0 %v2180, 56
    %v2217 = vpop.permute.xlu0 %2216
    %2218 = vrot.lane.b32.xlu0 %v2181, 56
    %v2219 = vpop.permute.xlu0 %2218
    %2220 = vrot.lane.b32.xlu0 %v2182, 56
    %v2221 = vpop.permute.xlu0 %2220
    %2222 = vrot.lane.b32.xlu0 %v2183, 56
    %v2223 = vpop.permute.xlu0 %2222
    %2224 = vrot.lane.b32.xlu0 %v2184, 56
    %v2225 = vpop.permute.xlu0 %2224
    %2226 = vrot.lane.b32.xlu0 %v2185, 56
    %v2227 = vpop.permute.xlu0 %2226
    %2228 = vrot.lane.b32.xlu0 %v2186, 56
    %v2229 = vpop.permute.xlu0 %2228
    %2230 = vrot.lane.b32.xlu0 %v2187, 56
    %v2231 = vpop.permute.xlu0 %2230
    %2232 = vrot.lane.b32.xlu0 %v2188, 56
    %v2233 = vpop.permute.xlu0 %2232
    %2234 = vrot.lane.b32.xlu0 %v2189, 56
    %v2235 = vpop.permute.xlu0 %2234
    %2236 = vrot.lane.b32.xlu0 %v2190, 56
    %v2237 = vpop.permute.xlu0 %2236
    %2238 = vrot.lane.b32.xlu0 %v2191, 56
    %v2239 = vpop.permute.xlu0 %2238
    %2256 = vst.msk [vmem:[#allocation3] sm:$0xf] %vm953, %v2209
    %2257 = vst.msk [vmem:[#allocation3 + $0x4] sm:$0xf] %vm953, %v2211
    %2258 = vst.msk [vmem:[#allocation3 + $0x8] sm:$0xf] %vm953, %v2213
    %2259 = vst.msk [vmem:[#allocation3 + $0xc] sm:$0xf] %vm953, %v2215
    %2260 = vst.msk [vmem:[#allocation3 + $0x10] sm:$0xf] %vm953, %v2217
    %2261 = vst.msk [vmem:[#allocation3 + $0x14] sm:$0xf] %vm953, %v2219
    %2262 = vst.msk [vmem:[#allocation3 + $0x18] sm:$0xf] %vm953, %v2221
    %2263 = vst.msk [vmem:[#allocation3 + $0x1c] sm:$0xf] %vm953, %v2223
    %2264 = vst.msk [vmem:[#allocation3 + $0x20] sm:$0xf] %vm953, %v2225
    %2265 = vst.msk [vmem:[#allocation3 + $0x24] sm:$0xf] %vm953, %v2227
    %2266 = vst.msk [vmem:[#allocation3 + $0x28] sm:$0xf] %vm953, %v2229
    %2267 = vst.msk [vmem:[#allocation3 + $0x2c] sm:$0xf] %vm953, %v2231
    %2268 = vst.msk [vmem:[#allocation3 + $0x30] sm:$0xf] %vm953, %v2233
    %2269 = vst.msk [vmem:[#allocation3 + $0x34] sm:$0xf] %vm953, %v2235
    %2270 = vst.msk [vmem:[#allocation3 + $0x38] sm:$0xf] %vm953, %v2237
    %2271 = vst.msk [vmem:[#allocation3 + $0x3c] sm:$0xf] %vm953, %v2239
    %v2272 = vld [vmem:[%s743 + $0x2] sm:$0xff]
    %v2273 = vld [vmem:[%s743 + $0x12] sm:$0xff]
    %v2274 = vld [vmem:[%s743 + $0x22] sm:$0xff]
    %v2275 = vld [vmem:[%s743 + $0x32] sm:$0xff]
    %v2276 = vld [vmem:[%s743 + $0x42] sm:$0xff]
    %v2277 = vld [vmem:[%s743 + $0x52] sm:$0xff]
    %v2278 = vld [vmem:[%s743 + $0x62] sm:$0xff]
    %v2279 = vld [vmem:[%s743 + $0x72] sm:$0xff]
    %v2280 = vld [vmem:[%s743 + $0xa2] sm:$0xff]
    %v2281 = vld [vmem:[%s743 + $0xb2] sm:$0xff]
    %v2282 = vld [vmem:[%s743 + $0xc2] sm:$0xff]
    %v2283 = vld [vmem:[%s743 + $0xd2] sm:$0xff]
    %v2284 = vld [vmem:[%s743 + $0xe2] sm:$0xff]
    %v2285 = vld [vmem:[%s743 + $0xf2] sm:$0xff]
    %v2286 = vld [vmem:[%s743 + $0x102] sm:$0xff]
    %v2287 = vld [vmem:[%s743 + $0x112] sm:$0xff]
    %v2288 = vpack.c.bf16 %v2272, %v2272
    %v2289 = vpack.c.bf16 %v2273, %v2273
    %v2290 = vpack.c.bf16 %v2274, %v2274
    %v2291 = vpack.c.bf16 %v2275, %v2275
    %v2292 = vpack.c.bf16 %v2276, %v2276
    %v2293 = vpack.c.bf16 %v2277, %v2277
    %v2294 = vpack.c.bf16 %v2278, %v2278
    %v2295 = vpack.c.bf16 %v2279, %v2279
    %v2296 = vpack.c.bf16 %v2280, %v2280
    %v2297 = vpack.c.bf16 %v2281, %v2281
    %v2298 = vpack.c.bf16 %v2282, %v2282
    %v2299 = vpack.c.bf16 %v2283, %v2283
    %v2300 = vpack.c.bf16 %v2284, %v2284
    %v2301 = vpack.c.bf16 %v2285, %v2285
    %v2302 = vpack.c.bf16 %v2286, %v2286
    %v2303 = vpack.c.bf16 %v2287, %v2287
    %2320 = vrot.lane.b32.xlu0 %v2288, 64
    %v2321 = vpop.permute.xlu0 %2320
    %2322 = vrot.lane.b32.xlu0 %v2289, 64
    %v2323 = vpop.permute.xlu0 %2322
    %2324 = vrot.lane.b32.xlu0 %v2290, 64
    %v2325 = vpop.permute.xlu0 %2324
    %2326 = vrot.lane.b32.xlu0 %v2291, 64
    %v2327 = vpop.permute.xlu0 %2326
    %2328 = vrot.lane.b32.xlu0 %v2292, 64
    %v2329 = vpop.permute.xlu0 %2328
    %2330 = vrot.lane.b32.xlu0 %v2293, 64
    %v2331 = vpop.permute.xlu0 %2330
    %2332 = vrot.lane.b32.xlu0 %v2294, 64
    %v2333 = vpop.permute.xlu0 %2332
    %2334 = vrot.lane.b32.xlu0 %v2295, 64
    %v2335 = vpop.permute.xlu0 %2334
    %2336 = vrot.lane.b32.xlu0 %v2296, 64
    %v2337 = vpop.permute.xlu0 %2336
    %2338 = vrot.lane.b32.xlu0 %v2297, 64
    %v2339 = vpop.permute.xlu0 %2338
    %2340 = vrot.lane.b32.xlu0 %v2298, 64
    %v2341 = vpop.permute.xlu0 %2340
    %2342 = vrot.lane.b32.xlu0 %v2299, 64
    %v2343 = vpop.permute.xlu0 %2342
    %2344 = vrot.lane.b32.xlu0 %v2300, 64
    %v2345 = vpop.permute.xlu0 %2344
    %2346 = vrot.lane.b32.xlu0 %v2301, 64
    %v2347 = vpop.permute.xlu0 %2346
    %2348 = vrot.lane.b32.xlu0 %v2302, 64
    %v2349 = vpop.permute.xlu0 %2348
    %2350 = vrot.lane.b32.xlu0 %v2303, 64
    %v2351 = vpop.permute.xlu0 %2350
    %2368 = vst.msk [vmem:[#allocation3] sm:$0xf] %vm1066, %v2321
    %2369 = vst.msk [vmem:[#allocation3 + $0x4] sm:$0xf] %vm1066, %v2323
    %2370 = vst.msk [vmem:[#allocation3 + $0x8] sm:$0xf] %vm1066, %v2325
    %2371 = vst.msk [vmem:[#allocation3 + $0xc] sm:$0xf] %vm1066, %v2327
    %2372 = vst.msk [vmem:[#allocation3 + $0x10] sm:$0xf] %vm1066, %v2329
    %2373 = vst.msk [vmem:[#allocation3 + $0x14] sm:$0xf] %vm1066, %v2331
    %2374 = vst.msk [vmem:[#allocation3 + $0x18] sm:$0xf] %vm1066, %v2333
    %2375 = vst.msk [vmem:[#allocation3 + $0x1c] sm:$0xf] %vm1066, %v2335
    %2376 = vst.msk [vmem:[#allocation3 + $0x20] sm:$0xf] %vm1066, %v2337
    %2377 = vst.msk [vmem:[#allocation3 + $0x24] sm:$0xf] %vm1066, %v2339
    %2378 = vst.msk [vmem:[#allocation3 + $0x28] sm:$0xf] %vm1066, %v2341
    %2379 = vst.msk [vmem:[#allocation3 + $0x2c] sm:$0xf] %vm1066, %v2343
    %2380 = vst.msk [vmem:[#allocation3 + $0x30] sm:$0xf] %vm1066, %v2345
    %2381 = vst.msk [vmem:[#allocation3 + $0x34] sm:$0xf] %vm1066, %v2347
    %2382 = vst.msk [vmem:[#allocation3 + $0x38] sm:$0xf] %vm1066, %v2349
    %2383 = vst.msk [vmem:[#allocation3 + $0x3c] sm:$0xf] %vm1066, %v2351
    %v2384 = vld [vmem:[#allocation3] sm:$0xf]
    %v2385 = vld [vmem:[#allocation3 + $0x4] sm:$0xf]
    %v2386 = vld [vmem:[#allocation3 + $0x8] sm:$0xf]
    %v2387 = vld [vmem:[#allocation3 + $0xc] sm:$0xf]
    %v2388 = vld [vmem:[#allocation3 + $0x10] sm:$0xf]
    %v2389 = vld [vmem:[#allocation3 + $0x14] sm:$0xf]
    %v2390 = vld [vmem:[#allocation3 + $0x18] sm:$0xf]
    %v2391 = vld [vmem:[#allocation3 + $0x1c] sm:$0xf]
    %v2392 = vld [vmem:[#allocation3 + $0x20] sm:$0xf]
    %v2393 = vld [vmem:[#allocation3 + $0x24] sm:$0xf]
    %v2394 = vld [vmem:[#allocation3 + $0x28] sm:$0xf]
    %v2395 = vld [vmem:[#allocation3 + $0x2c] sm:$0xf]
    %v2396 = vld [vmem:[#allocation3 + $0x30] sm:$0xf]
    %v2397 = vld [vmem:[#allocation3 + $0x34] sm:$0xf]
    %v2398 = vld [vmem:[#allocation3 + $0x38] sm:$0xf]
    %v2399 = vld [vmem:[#allocation3 + $0x3c] sm:$0xf]
    %v2400 = vld [vmem:[%s4] sm:$0xf]
    %v2401 = vld [vmem:[%s4 + $0x4] sm:$0xf]
    %v2402 = vld [vmem:[%s4 + $0x8] sm:$0xf]
    %v2403 = vld [vmem:[%s4 + $0xc] sm:$0xf]
    %v2404 = vld [vmem:[%s4 + $0x10] sm:$0xf]
    %v2405 = vld [vmem:[%s4 + $0x14] sm:$0xf]
    %v2406 = vld [vmem:[%s4 + $0x18] sm:$0xf]
    %v2407 = vld [vmem:[%s4 + $0x1c] sm:$0xf]
    %v2408 = vld [vmem:[%s4 + $0x20] sm:$0xf]
    %v2425 = vunpack.c.l.b16 %v2384
    %v2426 = vunpack.c.l.b16 %v2385
    %v2427 = vunpack.c.l.b16 %v2386
    %v2428 = vunpack.c.l.b16 %v2387
    %v2429 = vunpack.c.l.b16 %v2388
    %v2430 = vunpack.c.l.b16 %v2389
    %v2431 = vunpack.c.l.b16 %v2390
    %v2432 = vunpack.c.l.b16 %v2391
    %v2433 = vunpack.c.l.b16 %v2392
    %v2434 = vunpack.c.l.b16 %v2393
    %v2435 = vunpack.c.l.b16 %v2394
    %v2436 = vunpack.c.l.b16 %v2395
    %v2437 = vunpack.c.l.b16 %v2396
    %v2438 = vunpack.c.l.b16 %v2397
    %v2439 = vunpack.c.l.b16 %v2398
    %v2440 = vunpack.c.l.b16 %v2399
    %v2441 = vpack.c.b16 %v2426, %v2425
    %v2442 = vpack.c.b16 %v2428, %v2427
    %v2443 = vpack.c.b16 %v2430, %v2429
    %v2444 = vpack.c.b16 %v2432, %v2431
    %v2445 = vpack.c.b16 %v2434, %v2433
    %v2446 = vpack.c.b16 %v2436, %v2435
    %v2447 = vpack.c.b16 %v2438, %v2437
    %v2448 = vpack.c.b16 %v2440, %v2439
    %v2458 = vunpack.c.l.b16 %v2400
    %v2459 = vunpack.c.l.b16 %v2401
    %v2460 = vunpack.c.l.b16 %v2402
    %v2461 = vunpack.c.l.b16 %v2403
    %v2462 = vunpack.c.l.b16 %v2404
    %v2463 = vunpack.c.l.b16 %v2405
    %v2464 = vunpack.c.l.b16 %v2406
    %v2465 = vunpack.c.l.b16 %v2407
    %v2466 = vunpack.c.l.b16 %v2408
    %v2467 = vpack.c.b16 %v2459, %v2458
    %v2468 = vpack.c.b16 %v2461, %v2460
    %v2469 = vpack.c.b16 %v2463, %v2462
    %v2470 = vpack.c.b16 %v2465, %v2464
    %v2471 = vpack.c.b16 %v2466, %v2466
    %v2477 = vsel %vm1175, %v2441, 0
    %v2480 = vsel %vm1175, %v2442, 0
    %v2483 = vsel %vm1175, %v2443, 0
    %v2486 = vsel %vm1175, %v2444, 0
    %v2489 = vsel %vm1175, %v2445, 0
    %v2492 = vsel %vm1175, %v2446, 0
    %v2495 = vsel %vm1175, %v2447, 0
    %v2498 = vsel %vm1175, %v2448, 0
    %v2501 = vsel %vm1200, %v2471, 0
    %2503 = vmatpush.bf16.msra.mxu0 0
    %2504 = vmatpush.bf16.msra.mxu0 0
    %2505 = vmatpush.bf16.msra.mxu0 0
    %2506 = vmatpush.bf16.msra.mxu0 %v2501
    %2507 = vmatpush.bf16.msra.mxu0 %v2470
    %2508 = vmatpush.bf16.msra.mxu0 %v2469
    %2509 = vmatpush.bf16.msra.mxu0 %v2468
    %2510 = vmatpush.bf16.msra.mxu0 %v2467
    %2511 = vmatmul.bf16.gmra.mxu0 %v2477
    %v2512 = vpop.f32.mrf.mxu0
    %v2513 = vadd.f32 0.0, %v2512
    %v2514 = vpop.f32.mrf.mxu0
    %v2515 = vadd.f32 0.0, %v2514
    %2516 = vmatmul.bf16.gmra.mxu0 %v2480
    %v2517 = vpop.f32.mrf.mxu0
    %v2518 = vadd.f32 0.0, %v2517
    %v2519 = vpop.f32.mrf.mxu0
    %v2520 = vadd.f32 0.0, %v2519
    %2521 = vmatmul.bf16.gmra.mxu0 %v2483
    %v2522 = vpop.f32.mrf.mxu0
    %v2523 = vadd.f32 0.0, %v2522
    %v2524 = vpop.f32.mrf.mxu0
    %v2525 = vadd.f32 0.0, %v2524
    %2526 = vmatmul.bf16.gmra.mxu0 %v2486
    %v2527 = vpop.f32.mrf.mxu0
    %v2528 = vadd.f32 0.0, %v2527
    %v2529 = vpop.f32.mrf.mxu0
    %v2530 = vadd.f32 0.0, %v2529
    %2531 = vmatmul.bf16.gmra.mxu0 %v2489
    %v2532 = vpop.f32.mrf.mxu0
    %v2533 = vadd.f32 0.0, %v2532
    %v2534 = vpop.f32.mrf.mxu0
    %v2535 = vadd.f32 0.0, %v2534
    %2536 = vmatmul.bf16.gmra.mxu0 %v2492
    %v2537 = vpop.f32.mrf.mxu0
    %v2538 = vadd.f32 0.0, %v2537
    %v2539 = vpop.f32.mrf.mxu0
    %v2540 = vadd.f32 0.0, %v2539
    %2541 = vmatmul.bf16.gmra.mxu0 %v2495
    %v2542 = vpop.f32.mrf.mxu0
    %v2543 = vadd.f32 0.0, %v2542
    %v2544 = vpop.f32.mrf.mxu0
    %v2545 = vadd.f32 0.0, %v2544
    %2546 = vmatmul.bf16.gmra.mxu0 %v2498
    %v2547 = vpop.f32.mrf.mxu0
    %v2548 = vadd.f32 0.0, %v2547
    %v2549 = vpop.f32.mrf.mxu0
    %v2550 = vadd.f32 0.0, %v2549
    %2551 = vdwg.mxu0
    %v2552 = vld [vmem:[%s5] sm:$0x1]
    %v2553 = vld [vmem:[%s6] sm:$0x1]
    %v2554 = vsel %vm44, %v2513, 0.0
    %v2555 = vsel %vm44, %v2515, 0.0
    %v2556 = vadd.f32 %v2554, %v2555
    %v2557 = vsel %vm44, %v2518, 0.0
    %v2558 = vadd.f32 %v2556, %v2557
    %v2559 = vsel %vm44, %v2520, 0.0
    %v2560 = vadd.f32 %v2558, %v2559
    %v2561 = vsel %vm44, %v2523, 0.0
    %v2562 = vadd.f32 %v2560, %v2561
    %v2563 = vsel %vm44, %v2525, 0.0
    %v2564 = vadd.f32 %v2562, %v2563
    %v2565 = vsel %vm44, %v2528, 0.0
    %v2566 = vadd.f32 %v2564, %v2565
    %v2567 = vsel %vm44, %v2530, 0.0
    %v2568 = vadd.f32 %v2566, %v2567
    %v2569 = vsel %vm44, %v2533, 0.0
    %v2570 = vadd.f32 %v2568, %v2569
    %v2571 = vsel %vm44, %v2535, 0.0
    %v2572 = vadd.f32 %v2570, %v2571
    %v2573 = vsel %vm44, %v2538, 0.0
    %v2574 = vadd.f32 %v2572, %v2573
    %v2575 = vsel %vm44, %v2540, 0.0
    %v2576 = vadd.f32 %v2574, %v2575
    %v2577 = vsel %vm44, %v2543, 0.0
    %v2578 = vadd.f32 %v2576, %v2577
    %v2579 = vsel %vm44, %v2545, 0.0
    %v2580 = vadd.f32 %v2578, %v2579
    %v2581 = vsel %vm44, %v2548, 0.0
    %v2582 = vadd.f32 %v2580, %v2581
    %v2583 = vsel %vm44, %v2550, 0.0
    %v2584 = vadd.f32 %v2582, %v2583
    %v2585 = vrot.slane %v2584, 4
    %v2586 = vadd.f32 %v2584, %v2585
    %v2587 = vrot.slane %v2586, 2
    %v2588 = vadd.f32 %v2586, %v2587
    %v2589 = vrot.slane %v2588, 1
    %v2590 = vadd.f32 %v2588, %v2589
    %v2591 = vmul.f32 %v2590, %v1298
    %v2592 = vmul.f32 %v2513, %v2513
    %v2593 = vmul.f32 %v2515, %v2515
    %v2594 = vmul.f32 %v2518, %v2518
    %v2595 = vmul.f32 %v2520, %v2520
    %v2596 = vmul.f32 %v2523, %v2523
    %v2597 = vmul.f32 %v2525, %v2525
    %v2598 = vmul.f32 %v2528, %v2528
    %v2599 = vmul.f32 %v2530, %v2530
    %v2600 = vmul.f32 %v2533, %v2533
    %v2601 = vmul.f32 %v2535, %v2535
    %v2602 = vmul.f32 %v2538, %v2538
    %v2603 = vmul.f32 %v2540, %v2540
    %v2604 = vmul.f32 %v2543, %v2543
    %v2605 = vmul.f32 %v2545, %v2545
    %v2606 = vmul.f32 %v2548, %v2548
    %v2607 = vmul.f32 %v2550, %v2550
    %v2608 = vsel %vm44, %v2592, 0.0
    %v2609 = vsel %vm44, %v2593, 0.0
    %v2610 = vadd.f32 %v2608, %v2609
    %v2611 = vsel %vm44, %v2594, 0.0
    %v2612 = vadd.f32 %v2610, %v2611
    %v2613 = vsel %vm44, %v2595, 0.0
    %v2614 = vadd.f32 %v2612, %v2613
    %v2615 = vsel %vm44, %v2596, 0.0
    %v2616 = vadd.f32 %v2614, %v2615
    %v2617 = vsel %vm44, %v2597, 0.0
    %v2618 = vadd.f32 %v2616, %v2617
    %v2619 = vsel %vm44, %v2598, 0.0
    %v2620 = vadd.f32 %v2618, %v2619
    %v2621 = vsel %vm44, %v2599, 0.0
    %v2622 = vadd.f32 %v2620, %v2621
    %v2623 = vsel %vm44, %v2600, 0.0
    %v2624 = vadd.f32 %v2622, %v2623
    %v2625 = vsel %vm44, %v2601, 0.0
    %v2626 = vadd.f32 %v2624, %v2625
    %v2627 = vsel %vm44, %v2602, 0.0
    %v2628 = vadd.f32 %v2626, %v2627
    %v2629 = vsel %vm44, %v2603, 0.0
    %v2630 = vadd.f32 %v2628, %v2629
    %v2631 = vsel %vm44, %v2604, 0.0
    %v2632 = vadd.f32 %v2630, %v2631
    %v2633 = vsel %vm44, %v2605, 0.0
    %v2634 = vadd.f32 %v2632, %v2633
    %v2635 = vsel %vm44, %v2606, 0.0
    %v2636 = vadd.f32 %v2634, %v2635
    %v2637 = vsel %vm44, %v2607, 0.0
    %v2638 = vadd.f32 %v2636, %v2637
    %v2639 = vrot.slane %v2638, 4
    %v2640 = vadd.f32 %v2638, %v2639
    %v2641 = vrot.slane %v2640, 2
    %v2642 = vadd.f32 %v2640, %v2641
    %v2643 = vrot.slane %v2642, 1
    %v2644 = vadd.f32 %v2642, %v2643
    %v2645 = vmul.f32 %v2644, %v1298
    %v2646 = vmul.f32 %v2591, %v2591
    %v2647 = vsub.f32 %v2645, %v2646
    %v2648 = vadd.f32 %v2647, 1e-05
    %v2649 = vrsqrt.pop %v2648
    %v2650 = vmul.f32 %v2649, %v2648
    %v2651 = vmul.f32 %v2650, %v2649
    %v2652 = vmul.f32 0.5, %v2651
    %v2653 = vsub.f32 1.5, %v2652
    %v2654 = vmul.f32 %v2649, %v2653
    %vm2655 = vweird.f32 %v2648
    %vm2656 = vweird.f32 %v2649
    %vm2657 = vmor %vm2655, %vm2656
    %v2658 = vsel %vm2657, %v2649, %v2654
    %v2659 = vmul.f32 %v2552, %v2658
    %v2660 = vmul.f32 %v2591, %v2659
    %v2661 = vsub.f32 %v2553, %v2660
    %v2663 = vperm.slane %v2659, 0
    %v2665 = vmul.f32 %v2513, %v2663
    %v2666 = vmul.f32 %v2515, %v2663
    %v2667 = vmul.f32 %v2518, %v2663
    %v2668 = vmul.f32 %v2520, %v2663
    %v2669 = vmul.f32 %v2523, %v2663
    %v2670 = vmul.f32 %v2525, %v2663
    %v2671 = vmul.f32 %v2528, %v2663
    %v2672 = vmul.f32 %v2530, %v2663
    %v2673 = vmul.f32 %v2533, %v2663
    %v2674 = vmul.f32 %v2535, %v2663
    %v2675 = vmul.f32 %v2538, %v2663
    %v2676 = vmul.f32 %v2540, %v2663
    %v2677 = vmul.f32 %v2543, %v2663
    %v2678 = vmul.f32 %v2545, %v2663
    %v2679 = vmul.f32 %v2548, %v2663
    %v2680 = vmul.f32 %v2550, %v2663
    %v2682 = vperm.slane %v2661, 0
    %v2684 = vadd.f32 %v2665, %v2682
    %v2685 = vadd.f32 %v2666, %v2682
    %v2686 = vadd.f32 %v2667, %v2682
    %v2687 = vadd.f32 %v2668, %v2682
    %v2688 = vadd.f32 %v2669, %v2682
    %v2689 = vadd.f32 %v2670, %v2682
    %v2690 = vadd.f32 %v2671, %v2682
    %v2691 = vadd.f32 %v2672, %v2682
    %v2692 = vadd.f32 %v2673, %v2682
    %v2693 = vadd.f32 %v2674, %v2682
    %v2694 = vadd.f32 %v2675, %v2682
    %v2695 = vadd.f32 %v2676, %v2682
    %v2696 = vadd.f32 %v2677, %v2682
    %v2697 = vadd.f32 %v2678, %v2682
    %v2698 = vadd.f32 %v2679, %v2682
    %v2699 = vadd.f32 %v2680, %v2682
    %v2700 = vadd.f32 %v96, %v2684
    %v2701 = vadd.f32 %v97, %v2685
    %v2702 = vadd.f32 %v98, %v2686
    %v2703 = vadd.f32 %v99, %v2687
    %v2704 = vadd.f32 %v100, %v2688
    %v2705 = vadd.f32 %v101, %v2689
    %v2706 = vadd.f32 %v102, %v2690
    %v2707 = vadd.f32 %v103, %v2691
    %v2708 = vadd.f32 %v104, %v2692
    %v2709 = vadd.f32 %v105, %v2693
    %v2710 = vadd.f32 %v106, %v2694
    %v2711 = vadd.f32 %v107, %v2695
    %v2712 = vadd.f32 %v108, %v2696
    %v2713 = vadd.f32 %v109, %v2697
    %v2714 = vadd.f32 %v110, %v2698
    %v2715 = vadd.f32 %v111, %v2699
    %v2716 = vmax.f32 %v2700, 0.0
    %v2717 = vmax.f32 %v2701, 0.0
    %v2718 = vmax.f32 %v2702, 0.0
    %v2719 = vmax.f32 %v2703, 0.0
    %v2720 = vmax.f32 %v2704, 0.0
    %v2721 = vmax.f32 %v2705, 0.0
    %v2722 = vmax.f32 %v2706, 0.0
    %v2723 = vmax.f32 %v2707, 0.0
    %v2724 = vmax.f32 %v2708, 0.0
    %v2725 = vmax.f32 %v2709, 0.0
    %v2726 = vmax.f32 %v2710, 0.0
    %v2727 = vmax.f32 %v2711, 0.0
    %v2728 = vmax.f32 %v2712, 0.0
    %v2729 = vmax.f32 %v2713, 0.0
    %v2730 = vmax.f32 %v2714, 0.0
    %v2731 = vmax.f32 %v2715, 0.0
    %2732 = vst.msk [vmem:[#allocation7] sm:$0xff] %vm44, %v2716
    %2733 = vst.msk [vmem:[#allocation7 + $0x8] sm:$0xff] %vm44, %v2717
    %2734 = vst.msk [vmem:[#allocation7 + $0x10] sm:$0xff] %vm44, %v2718
    %2735 = vst.msk [vmem:[#allocation7 + $0x18] sm:$0xff] %vm44, %v2719
    %2736 = vst.msk [vmem:[#allocation7 + $0x20] sm:$0xff] %vm44, %v2720
    %2737 = vst.msk [vmem:[#allocation7 + $0x28] sm:$0xff] %vm44, %v2721
    %2738 = vst.msk [vmem:[#allocation7 + $0x30] sm:$0xff] %vm44, %v2722
    %2739 = vst.msk [vmem:[#allocation7 + $0x38] sm:$0xff] %vm44, %v2723
    %2740 = vst.msk [vmem:[#allocation7 + $0x40] sm:$0xff] %vm44, %v2724
    %2741 = vst.msk [vmem:[#allocation7 + $0x48] sm:$0xff] %vm44, %v2725
    %2742 = vst.msk [vmem:[#allocation7 + $0x50] sm:$0xff] %vm44, %v2726
    %2743 = vst.msk [vmem:[#allocation7 + $0x58] sm:$0xff] %vm44, %v2727
    %2744 = vst.msk [vmem:[#allocation7 + $0x60] sm:$0xff] %vm44, %v2728
    %2745 = vst.msk [vmem:[#allocation7 + $0x68] sm:$0xff] %vm44, %v2729
    %2746 = vst.msk [vmem:[#allocation7 + $0x70] sm:$0xff] %vm44, %v2730
    %2747 = vst.msk [vmem:[#allocation7 + $0x78] sm:$0xff] %vm44, %v2731
    // Predicated region
    $region34: #{tpu_custom_call.1} parent=1 // pred_check
      _
    $region35: #{tpu_custom_call.1} parent=1 // pred_check_branch
      %2749 = sbr.rel (0) target = $region37
    $region36: #{tpu_custom_call.1} parent=1 // pred_region
      %2751 = vsyncadd [#allocation6], 0
      %s2752 = sshll.u32 [#allocation7], 4
      %s2753 = int_to_ptr.vmem [resolvable:$true] %s2752
      %s2754 = sshll.u32 %s7, 4
      %s2755 = int_to_ptr.hbm [resolvable:$true] %s2754
      %2760 = dma.vmem_to_hbm [thread:$0]  %s2753, 2048, %s2755, [#allocation6], 128, 128, 8
    $region37: #{tpu_custom_call.1} parent=1 // pred_fallthru
      _
    // Predicated region
    $region38: #{tpu_custom_call.1} parent=1 // pred_check
      _
    $region39: #{tpu_custom_call.1} parent=1 // pred_check_branch
      %2762 = sbr.rel (0) target = $region41
    $region40: #{tpu_custom_call.1} parent=1 // pred_region
      %2764 = dma.done [#allocation6], 2048
    $region41: #{tpu_custom_call.1} parent=1 // pred_fallthru
      _
    %2765 = vsyncpa [#allocation5], 1
    %2766 = vsyncpa [#allocation6], 1

</llo_original>
